<compile_context>
chip_gen: v7x
topology: tpu7x:2x2x1
jax: 0.10.0
libtpu: 0.0.40
codegen_flags: <defaults>
</compile_context>

<pallas_src>
import functools

import jax
import jax.numpy as jnp
from jax.experimental import pallas as pl
from jax.experimental.pallas import tpu as pltpu

NEG = -1e30  # mask value for invalid window positions / lane padding


def _round_up(x, m):
    return (x + m - 1) // m * m


# ----------------------------- Pallas kernel -------------------------------

def _textcnn_fused_kernel(emb_ref, wconv_ref, mask_ref, bconv_ref,
                          wfc_ref, bfc_ref, o_ref):
    """Fused conv(+all widths) -> masked max-pool -> bias+ReLU -> FC.

    emb_ref  : (TB, Lp, E)  bf16  zero-padded embeddings
    wconv_ref: (S,  E, NF)  bf16  per-shift combined conv weights (lane-padded)
    mask_ref : (T,  NF)     f32   0 where position t valid for that column, else -1e30
    bconv_ref: (1,  NF)     f32   conv biases (zero in lane padding)
    wfc_ref  : (NF, NC)     bf16  FC weight (zero rows/cols in padding)
    bfc_ref  : (1,  NC)     f32   FC bias
    o_ref    : (TB, NC)     f32   logits (lane-padded; sliced outside)
    """
    TB, Lp, E = emb_ref.shape
    S, _, NF = wconv_ref.shape
    T = mask_ref.shape[0]

    # Conv over all kernel widths as S accumulated matmuls over window shifts.
    acc = jnp.zeros((TB * T, NF), jnp.float32)
    for j in range(S):                                    # S small & static
        x_j = emb_ref[:, j:j + T, :].reshape(TB * T, E)   # bf16 shifted slab
        acc = acc + jnp.dot(x_j, wconv_ref[j],
                            preferred_element_type=jnp.float32)

    # Mask invalid window positions per conv width, global max-pool over T,
    # then bias + ReLU (max commutes with +bias and clamp-at-0).
    acc = acc.reshape(TB, T, NF) + mask_ref[...]
    pooled = jnp.max(acc, axis=1)                         # (TB, NF)
    feats = jnp.maximum(pooled + bconv_ref[...], 0.0)     # (TB, NF) f32

    # Dropout is identity in eval mode.
    # TODO(synk): train-mode dropout would need pltpu.prng_* masking here.

    logits = jnp.dot(feats.astype(jnp.bfloat16), wfc_ref[...],
                     preferred_element_type=jnp.float32)
    o_ref[...] = logits + bfc_ref[...]


# ------------------------------ Model glue ---------------------------------

def init_params(key, vocab_size, embedding_size, num_classes, num_filters,
                kernel_sizes):
    keys = jax.random.split(key, 2 + 2 * len(kernel_sizes) + 2)
    params = {}
    params["embedding"] = jax.random.normal(
        keys[0], (vocab_size, embedding_size), jnp.float32)
    params["conv_w"] = []
    params["conv_b"] = []
    for i, k in enumerate(kernel_sizes):
        fan_in = 1 * k * embedding_size
        bound = 1.0 / jnp.sqrt(fan_in)
        params["conv_w"].append(jax.random.uniform(
            keys[1 + 2 * i], (num_filters, 1, k, embedding_size),
            jnp.float32, -bound, bound))
        params["conv_b"].append(jax.random.uniform(
            keys[2 + 2 * i], (num_filters,), jnp.float32, -bound, bound))
    fc_in = len(kernel_sizes) * num_filters
    bound = 1.0 / jnp.sqrt(fc_in)
    params["fc_w"] = jax.random.uniform(
        keys[-2], (num_classes, fc_in), jnp.float32, -bound, bound)
    params["fc_b"] = jax.random.uniform(
        keys[-1], (num_classes,), jnp.float32, -bound, bound)
    return params


def textcnn_forward(params, tokens, *, kernel_sizes, num_filters):
    embedding = params["embedding"]                      # (V, E) f32
    B, L = tokens.shape
    E = embedding.shape[1]
    F = num_filters
    C = params["fc_b"].shape[0]
    kmax = max(kernel_sizes)
    pmax = kmax - 1
    S = pmax + 1                                         # number of window shifts

    NF = _round_up(len(kernel_sizes) * F, 128)           # lane-dense filter width
    NC = _round_up(C, 128)                               # lane-dense class width
    T = _round_up(L + pmax, 8)                           # sublane-aligned #windows
    Lp = T + S - 1                                       # padded sequence length
    TB = 8                                               # batch tile (sublane-aligned)
    B_pad = _round_up(B, TB)

    # Embedding gather + padding (plain-JAX glue, cast to bf16 at the boundary).
    # TODO(synk): fuse the gather into the kernel (scalar-prefetch token ids +
    # memory_space=pl.ANY embedding table) once B*L is large enough to matter.
    emb = jnp.take(embedding, tokens, axis=0).astype(jnp.bfloat16)      # (B,L,E)
    emb = jnp.pad(emb, ((0, B_pad - B), (pmax, Lp - L - pmax), (0, 0)))  # (B_pad,Lp,E)

    # Pack conv weights per window shift into a single (S, E, NF) tensor, the
    # conv biases into (1, NF), and build the validity mask (T, NF).
    wconv = jnp.zeros((S, E, NF), jnp.float32)
    bconv = jnp.zeros((1, NF), jnp.float32)
    mask = jnp.full((T, NF), NEG, jnp.float32)
    t_idx = jnp.arange(T)
    for c, k in enumerate(kernel_sizes):
        w = params["conv_w"][c]                          # (F, 1, k, E) torch layout
        b = params["conv_b"][c]                          # (F,)
        for i in range(k):
            j = i + pmax - (k - 1)                       # shift into max-padded emb
            wconv = wconv.at[j, :, c * F:(c + 1) * F].set(w[:, 0, i, :].T)
        bconv = bconv.at[0, c * F:(c + 1) * F].set(b)
        col_mask = jnp.where(t_idx[:, None] < (L + k - 1), 0.0, NEG)     # (T,1)
        mask = mask.at[:, c * F:(c + 1) * F].set(
            jnp.broadcast_to(col_mask, (T, F)))
    wconv = wconv.astype(jnp.bfloat16)

    # FC weight/bias, lane-padded.
    n_feat = len(kernel_sizes) * F
    wfc = jnp.zeros((NF, NC), jnp.float32).at[:n_feat, :C].set(params["fc_w"].T)
    wfc = wfc.astype(jnp.bfloat16)
    bfc = jnp.zeros((1, NC), jnp.float32).at[0, :C].set(params["fc_b"])

    grid = (B_pad // TB,)
    out = pl.pallas_call(
        _textcnn_fused_kernel,
        out_shape=jax.ShapeDtypeStruct((B_pad, NC), jnp.float32),
        grid_spec=pltpu.PrefetchScalarGridSpec(
            num_scalar_prefetch=0,
            grid=grid,
            in_specs=[
                pl.BlockSpec((TB, Lp, E), lambda b: (b, 0, 0)),
                pl.BlockSpec((S, E, NF), lambda b: (0, 0, 0)),
                pl.BlockSpec((T, NF), lambda b: (0, 0)),
                pl.BlockSpec((1, NF), lambda b: (0, 0)),
                pl.BlockSpec((NF, NC), lambda b: (0, 0)),
                pl.BlockSpec((1, NC), lambda b: (0, 0)),
            ],
            out_specs=pl.BlockSpec((TB, NC), lambda b: (b, 0)),
        ),
        compiler_params=pltpu.CompilerParams(
            dimension_semantics=("parallel",),
            vmem_limit_bytes=64 * 1024 * 1024),
    )(emb, wconv, mask, bconv, wfc, bfc)

    return out[:B, :C]


# --------------------------------- Main -------------------------------------

if __name__ == "__main__":
    vocab_size = 50
    embedding_size = 32
    num_classes = 5
    num_filters = 16
    kernel_sizes = [3, 4, 5]
    B, L = 2, 8

    key = jax.random.PRNGKey(0)
    k_param, k_tok = jax.random.split(key)
    params = init_params(k_param, vocab_size, embedding_size, num_classes,
                         num_filters, kernel_sizes)
    tokens = jax.random.randint(k_tok, (B, L), 0, vocab_size, jnp.int32)

    fwd = functools.partial(textcnn_forward,
                            kernel_sizes=kernel_sizes,
                            num_filters=num_filters)
    logits = jax.jit(fwd)(params, tokens)
    jax.block_until_ready(logits)

    assert logits.shape == (B, num_classes), logits.shape
    assert logits.dtype == jnp.float32

    # Pure-JAX reference: canonical conv -> +bias -> ReLU -> max-pool -> FC,
    # using the same bf16-rounded inputs as the kernel, f32 accumulation.
    def bf(x):
        return x.astype(jnp.bfloat16).astype(jnp.float32)

    emb_ref = bf(jnp.take(params["embedding"], tokens, axis=0))       # (B, L, E)
    feats = []
    for k, w, b in zip(kernel_sizes, params["conv_w"], params["conv_b"]):
        wk = bf(w)                                                    # (F,1,k,E)
        padded = jnp.pad(emb_ref, ((0, 0), (k - 1, k - 1), (0, 0)))
        Tk = L + k - 1
        s = sum(jnp.einsum("ble,fe->blf", padded[:, i:i + Tk, :], wk[:, 0, i, :])
                for i in range(k)) + b[None, None, :]
        feats.append(jnp.max(jnp.maximum(s, 0.0), axis=1))            # (B, F)
    ref_feats = bf(jnp.concatenate(feats, axis=1))                    # (B, 3F)
    ref = ref_feats @ bf(params["fc_w"]).T + params["fc_b"][None, :]

    max_err = jnp.max(jnp.abs(logits - ref))
    assert jnp.allclose(logits, ref, atol=5e-3, rtol=5e-3), float(max_err)

    print("KERNEL_OK")
</pallas_src>

<mosaic_0001>
module attributes {stable_mosaic.version = 11 : i64} {
  func.func @_textcnn_fused_kernel(%arg0: i32, %arg1: memref<8x20x32xbf16, #tpu.memory_space<vmem>>, %arg2: memref<5x32x128xbf16, #tpu.memory_space<vmem>>, %arg3: memref<16x128xf32, #tpu.memory_space<vmem>>, %arg4: memref<1x128xf32, #tpu.memory_space<vmem>>, %arg5: memref<128x128xbf16, #tpu.memory_space<vmem>>, %arg6: memref<1x128xf32, #tpu.memory_space<vmem>>, %arg7: memref<8x128xf32, #tpu.memory_space<vmem>>) attributes {dimension_semantics = [#tpu.dimension_semantics<parallel>], iteration_bounds = array<i64: 1>, scalar_prefetch = 0 : i64, scratch_operands = 0 : i64, tpu.core_type = #tpu.core_type<tc>, window_params = [{transform_indices = @transform_0, window_bounds = array<i64: 8, 20, 32>}, {pipeline_mode = #tpu.pipeline_mode<synchronous>, transform_indices = @transform_1, window_bounds = array<i64: 5, 32, 128>}, {pipeline_mode = #tpu.pipeline_mode<synchronous>, transform_indices = @transform_2, window_bounds = array<i64: 16, 128>}, {pipeline_mode = #tpu.pipeline_mode<synchronous>, transform_indices = @transform_3, window_bounds = array<i64: 1, 128>}, {pipeline_mode = #tpu.pipeline_mode<synchronous>, transform_indices = @transform_4, window_bounds = array<i64: 128, 128>}, {pipeline_mode = #tpu.pipeline_mode<synchronous>, transform_indices = @transform_5, window_bounds = array<i64: 1, 128>}, {transform_indices = @transform_6, window_bounds = array<i64: 8, 128>}]} {
    %cst = arith.constant 0.000000e+00 : f32
    %0 = vector.broadcast %cst : f32 to vector<128x128xf32>
    %c0 = arith.constant 0 : index
    %c0_0 = arith.constant 0 : index
    %c0_1 = arith.constant 0 : index
    %1 = vector.load %arg1[%c0, %c0_0, %c0_1] : memref<8x20x32xbf16, #tpu.memory_space<vmem>>, vector<8x16x32xbf16>
    %2 = vector.shape_cast %1 : vector<8x16x32xbf16> to vector<128x32xbf16>
    %c0_2 = arith.constant 0 : index
    %c0_3 = arith.constant 0 : index
    %c0_4 = arith.constant 0 : index
    %3 = vector.load %arg2[%c0_2, %c0_3, %c0_4] : memref<5x32x128xbf16, #tpu.memory_space<vmem>>, vector<1x32x128xbf16>
    %4 = vector.shape_cast %3 : vector<1x32x128xbf16> to vector<32x128xbf16>
    %cst_5 = arith.constant dense<0.000000e+00> : vector<128x128xf32>
    %5 = tpu.matmul %2, %4, %cst_5 {dimension_numbers = #tpu.dot_dimension_numbers<[1], [0], [0], [1], [0, 0, 1, 1], [], []>} : vector<128x32xbf16>, vector<32x128xbf16>, vector<128x128xf32> -> vector<128x128xf32>
    %6 = arith.addf %0, %5 : vector<128x128xf32>
    %c0_6 = arith.constant 0 : index
    %c1 = arith.constant 1 : index
    %c0_7 = arith.constant 0 : index
    %7 = vector.load %arg1[%c0_6, %c1, %c0_7] : memref<8x20x32xbf16, #tpu.memory_space<vmem>>, vector<8x16x32xbf16>
    %8 = vector.shape_cast %7 : vector<8x16x32xbf16> to vector<128x32xbf16>
    %c1_8 = arith.constant 1 : index
    %c0_9 = arith.constant 0 : index
    %c0_10 = arith.constant 0 : index
    %9 = vector.load %arg2[%c1_8, %c0_9, %c0_10] : memref<5x32x128xbf16, #tpu.memory_space<vmem>>, vector<1x32x128xbf16>
    %10 = vector.shape_cast %9 : vector<1x32x128xbf16> to vector<32x128xbf16>
    %cst_11 = arith.constant dense<0.000000e+00> : vector<128x128xf32>
    %11 = tpu.matmul %8, %10, %cst_11 {dimension_numbers = #tpu.dot_dimension_numbers<[1], [0], [0], [1], [0, 0, 1, 1], [], []>} : vector<128x32xbf16>, vector<32x128xbf16>, vector<128x128xf32> -> vector<128x128xf32>
    %12 = arith.addf %6, %11 : vector<128x128xf32>
    %c0_12 = arith.constant 0 : index
    %c2 = arith.constant 2 : index
    %c0_13 = arith.constant 0 : index
    %13 = vector.load %arg1[%c0_12, %c2, %c0_13] : memref<8x20x32xbf16, #tpu.memory_space<vmem>>, vector<8x16x32xbf16>
    %14 = vector.shape_cast %13 : vector<8x16x32xbf16> to vector<128x32xbf16>
    %c2_14 = arith.constant 2 : index
    %c0_15 = arith.constant 0 : index
    %c0_16 = arith.constant 0 : index
    %15 = vector.load %arg2[%c2_14, %c0_15, %c0_16] : memref<5x32x128xbf16, #tpu.memory_space<vmem>>, vector<1x32x128xbf16>
    %16 = vector.shape_cast %15 : vector<1x32x128xbf16> to vector<32x128xbf16>
    %cst_17 = arith.constant dense<0.000000e+00> : vector<128x128xf32>
    %17 = tpu.matmul %14, %16, %cst_17 {dimension_numbers = #tpu.dot_dimension_numbers<[1], [0], [0], [1], [0, 0, 1, 1], [], []>} : vector<128x32xbf16>, vector<32x128xbf16>, vector<128x128xf32> -> vector<128x128xf32>
    %18 = arith.addf %12, %17 : vector<128x128xf32>
    %c0_18 = arith.constant 0 : index
    %c3 = arith.constant 3 : index
    %c0_19 = arith.constant 0 : index
    %19 = vector.load %arg1[%c0_18, %c3, %c0_19] : memref<8x20x32xbf16, #tpu.memory_space<vmem>>, vector<8x16x32xbf16>
    %20 = vector.shape_cast %19 : vector<8x16x32xbf16> to vector<128x32xbf16>
    %c3_20 = arith.constant 3 : index
    %c0_21 = arith.constant 0 : index
    %c0_22 = arith.constant 0 : index
    %21 = vector.load %arg2[%c3_20, %c0_21, %c0_22] : memref<5x32x128xbf16, #tpu.memory_space<vmem>>, vector<1x32x128xbf16>
    %22 = vector.shape_cast %21 : vector<1x32x128xbf16> to vector<32x128xbf16>
    %cst_23 = arith.constant dense<0.000000e+00> : vector<128x128xf32>
    %23 = tpu.matmul %20, %22, %cst_23 {dimension_numbers = #tpu.dot_dimension_numbers<[1], [0], [0], [1], [0, 0, 1, 1], [], []>} : vector<128x32xbf16>, vector<32x128xbf16>, vector<128x128xf32> -> vector<128x128xf32>
    %24 = arith.addf %18, %23 : vector<128x128xf32>
    %c0_24 = arith.constant 0 : index
    %c4 = arith.constant 4 : index
    %c0_25 = arith.constant 0 : index
    %25 = vector.load %arg1[%c0_24, %c4, %c0_25] : memref<8x20x32xbf16, #tpu.memory_space<vmem>>, vector<8x16x32xbf16>
    %26 = vector.shape_cast %25 : vector<8x16x32xbf16> to vector<128x32xbf16>
    %c4_26 = arith.constant 4 : index
    %c0_27 = arith.constant 0 : index
    %c0_28 = arith.constant 0 : index
    %27 = vector.load %arg2[%c4_26, %c0_27, %c0_28] : memref<5x32x128xbf16, #tpu.memory_space<vmem>>, vector<1x32x128xbf16>
    %28 = vector.shape_cast %27 : vector<1x32x128xbf16> to vector<32x128xbf16>
    %cst_29 = arith.constant dense<0.000000e+00> : vector<128x128xf32>
    %29 = tpu.matmul %26, %28, %cst_29 {dimension_numbers = #tpu.dot_dimension_numbers<[1], [0], [0], [1], [0, 0, 1, 1], [], []>} : vector<128x32xbf16>, vector<32x128xbf16>, vector<128x128xf32> -> vector<128x128xf32>
    %30 = arith.addf %24, %29 : vector<128x128xf32>
    %31 = vector.shape_cast %30 : vector<128x128xf32> to vector<8x16x128xf32>
    %c0_30 = arith.constant 0 : index
    %c0_31 = arith.constant 0 : index
    %32 = vector.load %arg3[%c0_30, %c0_31] : memref<16x128xf32, #tpu.memory_space<vmem>>, vector<16x128xf32>
    %33 = vector.shape_cast %32 : vector<16x128xf32> to vector<1x16x128xf32>
    %34 = vector.broadcast %33 : vector<1x16x128xf32> to vector<8x16x128xf32>
    %35 = arith.addf %31, %34 : vector<8x16x128xf32>
    %cst_32 = arith.constant dense<0xFF800000> : vector<8x128xf32>
    %36 = vector.multi_reduction <maximumf>, %35, %cst_32 [1] : vector<8x16x128xf32> to vector<8x128xf32>
    %c0_33 = arith.constant 0 : index
    %c0_34 = arith.constant 0 : index
    %37 = vector.load %arg4[%c0_33, %c0_34] : memref<1x128xf32, #tpu.memory_space<vmem>>, vector<1x128xf32>
    %38 = vector.broadcast %37 : vector<1x128xf32> to vector<8x128xf32>
    %39 = arith.addf %36, %38 : vector<8x128xf32>
    %cst_35 = arith.constant 0.000000e+00 : f32
    %40 = vector.broadcast %cst_35 : f32 to vector<8x128xf32>
    %41 = arith.maximumf %39, %40 : vector<8x128xf32>
    %42 = arith.truncf %41 : vector<8x128xf32> to vector<8x128xbf16>
    %c0_36 = arith.constant 0 : index
    %c0_37 = arith.constant 0 : index
    %43 = vector.load %arg5[%c0_36, %c0_37] : memref<128x128xbf16, #tpu.memory_space<vmem>>, vector<128x128xbf16>
    %cst_38 = arith.constant dense<0.000000e+00> : vector<8x128xf32>
    %44 = tpu.matmul %42, %43, %cst_38 {dimension_numbers = #tpu.dot_dimension_numbers<[1], [0], [0], [1], [0, 0, 1, 1], [], []>} : vector<8x128xbf16>, vector<128x128xbf16>, vector<8x128xf32> -> vector<8x128xf32>
    %c0_39 = arith.constant 0 : index
    %c0_40 = arith.constant 0 : index
    %45 = vector.load %arg6[%c0_39, %c0_40] : memref<1x128xf32, #tpu.memory_space<vmem>>, vector<1x128xf32>
    %46 = vector.broadcast %45 : vector<1x128xf32> to vector<8x128xf32>
    %47 = arith.addf %44, %46 : vector<8x128xf32>
    %c0_41 = arith.constant 0 : index
    %c0_42 = arith.constant 0 : index
    %48 = vector.load %arg7[%c0_41, %c0_42] : memref<8x128xf32, #tpu.memory_space<vmem>>, vector<8x128xf32>
    tpu.vector_store %arg7[%c0_41, %c0_42], %47 {strides = array<i32>} : memref<8x128xf32, #tpu.memory_space<vmem>>, vector<8x128xf32>,
    return
  }
  func.func @transform_0(%arg0: i32) -> (i32, i32, i32) {
    %c0_i32 = arith.constant 0 : i32
    %c0_i32_0 = arith.constant 0 : i32
    %c0_i32_1 = arith.constant 0 : i32
    return %arg0, %c0_i32, %c0_i32_0 : i32, i32, i32
  }
  func.func @transform_1(%arg0: i32) -> (i32, i32, i32) {
    %c0_i32 = arith.constant 0 : i32
    %c0_i32_0 = arith.constant 0 : i32
    %c0_i32_1 = arith.constant 0 : i32
    %c0_i32_2 = arith.constant 0 : i32
    return %c0_i32, %c0_i32_0, %c0_i32_1 : i32, i32, i32
  }
  func.func @transform_2(%arg0: i32) -> (i32, i32) {
    %c0_i32 = arith.constant 0 : i32
    %c0_i32_0 = arith.constant 0 : i32
    %c0_i32_1 = arith.constant 0 : i32
    return %c0_i32, %c0_i32_0 : i32, i32
  }
  func.func @transform_3(%arg0: i32) -> (i32, i32) {
    %c0_i32 = arith.constant 0 : i32
    %c0_i32_0 = arith.constant 0 : i32
    %c0_i32_1 = arith.constant 0 : i32
    return %c0_i32, %c0_i32_0 : i32, i32
  }
  func.func @transform_4(%arg0: i32) -> (i32, i32) {
    %c0_i32 = arith.constant 0 : i32
    %c0_i32_0 = arith.constant 0 : i32
    %c0_i32_1 = arith.constant 0 : i32
    return %c0_i32, %c0_i32_0 : i32, i32
  }
  func.func @transform_5(%arg0: i32) -> (i32, i32) {
    %c0_i32 = arith.constant 0 : i32
    %c0_i32_0 = arith.constant 0 : i32
    %c0_i32_1 = arith.constant 0 : i32
    return %c0_i32, %c0_i32_0 : i32, i32
  }
  func.func @transform_6(%arg0: i32) -> (i32, i32) {
    %c0_i32 = arith.constant 0 : i32
    %c0_i32_0 = arith.constant 0 : i32
    return %arg0, %c0_i32 : i32, i32
  }
}

</mosaic_0001>

<llo_original>
// kernel: textcnn_forward.1
$region0: #{textcnn_forward.1}
  #allocation0 [shape = 'u32[]', space=smem, size = 0x4, offset = 0x4, fixed_abs, tag = 'smem constant byte address 0x4 - core index']
  #allocation1 [shape = 'u32[144,128]{1,0:T(1,128)}', space=vmem, size = 0x12000, scoped, tag = 'internal scratch']
  %s0 = inlined_call_operand.hbm [shape: bf16[8,20,32], index: 0, kind: input, shape index: {}]
  %s1 = inlined_call_operand.hbm [shape: bf16[5,32,128], index: 1, kind: input, shape index: {}]
  %s2 = inlined_call_operand.hbm [shape: f32[16,128], index: 2, kind: input, shape index: {}]
  %s3 = inlined_call_operand.hbm [shape: f32[1,128], index: 3, kind: input, shape index: {}]
  %s4 = inlined_call_operand.hbm [shape: bf16[128,128], index: 4, kind: input, shape index: {}]
  %s5 = inlined_call_operand.hbm [shape: f32[1,128], index: 5, kind: input, shape index: {}]
  %s6 = inlined_call_operand.hbm [shape: f32[8,128], index: 6, kind: output, shape index: {}]
  %s7 = sld [smem:[#allocation0]]
  $region58: #{textcnn_forward.1} parent=0
    _
  %s9 = ssub.s32 1, %s7
  %s10 = scalar_select 0, %s9, %s7
  $region1: #{textcnn_forward.1} parent=0
    #allocation2 [shape = 'u8[49152]{0}', space=vmem, size = 0xc000, scoped, tag = 'input window, operand 0, single buffered']
    #allocation3 [shape = 's32[1]{0}', space=sflag, size = 0x4, scoped, tag = 'scoped memory for textcnn_forward.1']
    #allocation4 [shape = 's32[1]{0}', space=sflag, size = 0x4, scoped, tag = 'scoped memory for textcnn_forward.1']
    #allocation5 [shape = 'u8[40960]{0}', space=vmem, size = 0xa000, scoped, tag = 'input window, operand 1, single buffered']
    #allocation6 [shape = 's32[1]{0}', space=sflag, size = 0x4, scoped, tag = 'scoped memory for textcnn_forward.1']
    #allocation7 [shape = 'u8[8192]{0}', space=vmem, size = 0x2000, scoped, tag = 'input window, operand 2, single buffered']
    #allocation8 [shape = 'u8[512]{0}', space=vmem, size = 0x400, scoped, tag = 'input window, operand 3, single buffered']
    #allocation9 [shape = 's32[1]{0}', space=sflag, size = 0x4, scoped, tag = 'scoped memory for textcnn_forward.1']
    #allocation10 [shape = 'u8[32768]{0}', space=vmem, size = 0x8000, scoped, tag = 'input window, operand 4, single buffered']
    #allocation11 [shape = 'u8[512]{0}', space=vmem, size = 0x400, scoped, tag = 'input window, operand 5, single buffered']
    #allocation12 [shape = 's32[1]{0}', space=sflag, size = 0x4, scoped, tag = 'scoped memory for textcnn_forward.1']
    #allocation13 [shape = 'u8[4096]{0}', space=vmem, size = 0x1000, scoped, tag = 'output window, operand 0, single buffered']
    %11 = vsyncpa [#allocation3], 0
    %12 = vsyncpa [#allocation6], 0
    %13 = vsyncpa [#allocation9], 0
    %14 = vsyncpa [#allocation12], 0
    %15 = vsyncpa [#allocation4], 0
    // Predicated region
    $region2: #{textcnn_forward.1} parent=1 // pred_check
      _
    $region3: #{textcnn_forward.1} parent=1 // pred_check_branch
      %17 = sbr.rel (0) target = $region5
    $region4: #{textcnn_forward.1} parent=1 // pred_region
      %s19 = ssub.s32 1536, 1536
      %20 = vsyncadd [#allocation3], %s19
      %s21 = sshll.u32 [#allocation2], 4
      %s22 = int_to_ptr.vmem [resolvable:$true] %s21
      %27 = dma.hbm_to_vmem [thread:$0]  %s0, 1536, %s22, [#allocation3], 64, 64, 4
    $region5: #{textcnn_forward.1} parent=1 // pred_fallthru
      _
    // Predicated region
    $region6: #{textcnn_forward.1} parent=1 // pred_check
      _
    $region7: #{textcnn_forward.1} parent=1 // pred_check_branch
      %29 = sbr.rel (0) target = $region9
    $region8: #{textcnn_forward.1} parent=1 // pred_region
      %s31 = ssub.s32 1280, 1280
      %32 = vsyncadd [#allocation6], %s31
      %s33 = sshll.u32 [#allocation5], 4
      %s34 = int_to_ptr.vmem [resolvable:$true] %s33
      %39 = dma.hbm_to_vmem [thread:$0]  %s1, 1280, %s34, [#allocation6], 64, 64, 4
    $region9: #{textcnn_forward.1} parent=1 // pred_fallthru
      _
    // Predicated region
    $region10: #{textcnn_forward.1} parent=1 // pred_check
      _
    $region11: #{textcnn_forward.1} parent=1 // pred_check_branch
      %41 = sbr.rel (0) target = $region13
    $region12: #{textcnn_forward.1} parent=1 // pred_region
      %s43 = ssub.s32 256, 256
      %44 = vsyncadd [#allocation6], %s43
      %s45 = sshll.u32 [#allocation7], 4
      %s46 = int_to_ptr.vmem [resolvable:$true] %s45
      %51 = dma.hbm_to_vmem [thread:$0]  %s2, 256, %s46, [#allocation6], 128, 128, 8
    $region13: #{textcnn_forward.1} parent=1 // pred_fallthru
      _
    // Predicated region
    $region14: #{textcnn_forward.1} parent=1 // pred_check
      _
    $region15: #{textcnn_forward.1} parent=1 // pred_check_branch
      %53 = sbr.rel (0) target = $region17
    $region16: #{textcnn_forward.1} parent=1 // pred_region
      %s55 = ssub.s32 16, 16
      %56 = vsyncadd [#allocation9], %s55
      %s58 = sshll.u32 [#allocation8], 4
      %s59 = int_to_ptr.vmem [resolvable:$true] %s58
      %61 = dma.hbm_to_vmem [thread:$0]  %s3, 16, %s59, [#allocation9]
    $region17: #{textcnn_forward.1} parent=1 // pred_fallthru
      _
    // Predicated region
    $region18: #{textcnn_forward.1} parent=1 // pred_check
      _
    $region19: #{textcnn_forward.1} parent=1 // pred_check_branch
      %63 = sbr.rel (0) target = $region21
    $region20: #{textcnn_forward.1} parent=1 // pred_region
      %s65 = ssub.s32 1024, 1024
      %66 = vsyncadd [#allocation9], %s65
      %s67 = sshll.u32 [#allocation10], 4
      %s68 = int_to_ptr.vmem [resolvable:$true] %s67
      %73 = dma.hbm_to_vmem [thread:$0]  %s4, 1024, %s68, [#allocation9], 64, 64, 4
    $region21: #{textcnn_forward.1} parent=1 // pred_fallthru
      _
    // Predicated region
    $region22: #{textcnn_forward.1} parent=1 // pred_check
      _
    $region23: #{textcnn_forward.1} parent=1 // pred_check_branch
      %75 = sbr.rel (0) target = $region25
    $region24: #{textcnn_forward.1} parent=1 // pred_region
      %s77 = ssub.s32 16, 16
      %78 = vsyncadd [#allocation12], %s77
      %s80 = sshll.u32 [#allocation11], 4
      %s81 = int_to_ptr.vmem [resolvable:$true] %s80
      %83 = dma.hbm_to_vmem [thread:$0]  %s5, 16, %s81, [#allocation12]
    $region25: #{textcnn_forward.1} parent=1 // pred_fallthru
      _
    // Predicated region
    $region26: #{textcnn_forward.1} parent=1 // pred_check
      _
    $region27: #{textcnn_forward.1} parent=1 // pred_check_branch
      %85 = sbr.rel (0) target = $region29
    $region28: #{textcnn_forward.1} parent=1 // pred_region
      %86 = dma.done [#allocation3], 1536
    $region29: #{textcnn_forward.1} parent=1 // pred_fallthru
      _
    // Predicated region
    $region30: #{textcnn_forward.1} parent=1 // pred_check
      _
    $region31: #{textcnn_forward.1} parent=1 // pred_check_branch
      %88 = sbr.rel (0) target = $region33
    $region32: #{textcnn_forward.1} parent=1 // pred_region
      %89 = dma.done [#allocation6], 1280
    $region33: #{textcnn_forward.1} parent=1 // pred_fallthru
      _
    // Predicated region
    $region34: #{textcnn_forward.1} parent=1 // pred_check
      _
    $region35: #{textcnn_forward.1} parent=1 // pred_check_branch
      %91 = sbr.rel (0) target = $region37
    $region36: #{textcnn_forward.1} parent=1 // pred_region
      %92 = dma.done [#allocation6], 256
    $region37: #{textcnn_forward.1} parent=1 // pred_fallthru
      _
    // Predicated region
    $region38: #{textcnn_forward.1} parent=1 // pred_check
      _
    $region39: #{textcnn_forward.1} parent=1 // pred_check_branch
      %94 = sbr.rel (0) target = $region41
    $region40: #{textcnn_forward.1} parent=1 // pred_region
      %95 = dma.done [#allocation9], 16
    $region41: #{textcnn_forward.1} parent=1 // pred_fallthru
      _
    // Predicated region
    $region42: #{textcnn_forward.1} parent=1 // pred_check
      _
    $region43: #{textcnn_forward.1} parent=1 // pred_check_branch
      %97 = sbr.rel (0) target = $region45
    $region44: #{textcnn_forward.1} parent=1 // pred_region
      %98 = dma.done [#allocation9], 1024
    $region45: #{textcnn_forward.1} parent=1 // pred_fallthru
      _
    // Predicated region
    $region46: #{textcnn_forward.1} parent=1 // pred_check
      _
    $region47: #{textcnn_forward.1} parent=1 // pred_check_branch
      %100 = sbr.rel (0) target = $region49
    $region48: #{textcnn_forward.1} parent=1 // pred_region
      %101 = dma.done [#allocation12], 16
    $region49: #{textcnn_forward.1} parent=1 // pred_fallthru
      _
    %v103 = vld [vmem:[#allocation2] sm:$0xf]
    %v104 = vld [vmem:[#allocation2 + $0x4] sm:$0xf]
    %v105 = vld [vmem:[#allocation2 + $0xc] sm:$0xf]
    %v106 = vld [vmem:[#allocation2 + $0x10] sm:$0xf]
    %v107 = vld [vmem:[#allocation2 + $0x18] sm:$0xf]
    %v108 = vld [vmem:[#allocation2 + $0x1c] sm:$0xf]
    %v109 = vld [vmem:[#allocation2 + $0x24] sm:$0xf]
    %v110 = vld [vmem:[#allocation2 + $0x28] sm:$0xf]
    %v111 = vld [vmem:[#allocation2 + $0x30] sm:$0xf]
    %v112 = vld [vmem:[#allocation2 + $0x34] sm:$0xf]
    %v113 = vld [vmem:[#allocation2 + $0x3c] sm:$0xf]
    %v114 = vld [vmem:[#allocation2 + $0x40] sm:$0xf]
    %v115 = vld [vmem:[#allocation2 + $0x48] sm:$0xf]
    %v116 = vld [vmem:[#allocation2 + $0x4c] sm:$0xf]
    %v117 = vld [vmem:[#allocation2 + $0x54] sm:$0xf]
    %v118 = vld [vmem:[#allocation2 + $0x58] sm:$0xf]
    %v119 = vld [vmem:[#allocation5] sm:$0xf]
    %v120 = vld [vmem:[#allocation5 + $0x4] sm:$0xf]
    %v121 = vld [vmem:[#allocation5 + $0x8] sm:$0xf]
    %v122 = vld [vmem:[#allocation5 + $0xc] sm:$0xf]
    %v123 = vld [vmem:[#allocation2 + $0x8] sm:$0x1]
    %v124 = vld [vmem:[#allocation2 + $0x14] sm:$0x1]
    %v125 = vld [vmem:[#allocation2 + $0x20] sm:$0x1]
    %v126 = vld [vmem:[#allocation2 + $0x2c] sm:$0x1]
    %v127 = vld [vmem:[#allocation2 + $0x38] sm:$0x1]
    %v128 = vld [vmem:[#allocation2 + $0x44] sm:$0x1]
    %v129 = vld [vmem:[#allocation2 + $0x50] sm:$0x1]
    %v130 = vld [vmem:[#allocation2 + $0x5c] sm:$0x1]
    %vm131 = vsmask.f32 3328
    %vm132 = vsmask.f32 7440
    %vm133 = vmor %vm131, %vm132
    %v135 = vshrl.u32 %v103, 16
    %v137 = vrot.slane %v135, 4
    %v138 = vshll.u32 %v103, 16
    %v140 = vrot.slane %v138, 5
    %v141 = vor.u32 %v137, %v140
    %v142 = vrot.slane %v141, 4
    %v144 = vshll.u32 %v104, 16
    %v146 = vrot.slane %v144, 5
    %v147 = vsel %vm133, %v142, %v146
    %v148 = vshrl.u32 %v104, 16
    %v150 = vrot.slane %v148, 4
    %v151 = vor.u32 %v150, %v146
    %v152 = vrot.slane %v151, 4
    %v154 = vshll.u32 %v123, 16
    %v156 = vrot.slane %v154, 5
    %v157 = vsel %vm133, %v152, %v156
    %v159 = vshrl.u32 %v105, 16
    %v161 = vrot.slane %v159, 4
    %v162 = vshll.u32 %v105, 16
    %v164 = vrot.slane %v162, 5
    %v165 = vor.u32 %v161, %v164
    %v166 = vrot.slane %v165, 4
    %v168 = vshll.u32 %v106, 16
    %v170 = vrot.slane %v168, 5
    %v171 = vsel %vm133, %v166, %v170
    %v172 = vshrl.u32 %v106, 16
    %v174 = vrot.slane %v172, 4
    %v175 = vor.u32 %v174, %v170
    %v176 = vrot.slane %v175, 4
    %v178 = vshll.u32 %v124, 16
    %v180 = vrot.slane %v178, 5
    %v181 = vsel %vm133, %v176, %v180
    %v183 = vshrl.u32 %v107, 16
    %v185 = vrot.slane %v183, 4
    %v186 = vshll.u32 %v107, 16
    %v188 = vrot.slane %v186, 5
    %v189 = vor.u32 %v185, %v188
    %v190 = vrot.slane %v189, 4
    %v192 = vshll.u32 %v108, 16
    %v194 = vrot.slane %v192, 5
    %v195 = vsel %vm133, %v190, %v194
    %v196 = vshrl.u32 %v108, 16
    %v198 = vrot.slane %v196, 4
    %v199 = vor.u32 %v198, %v194
    %v200 = vrot.slane %v199, 4
    %v202 = vshll.u32 %v125, 16
    %v204 = vrot.slane %v202, 5
    %v205 = vsel %vm133, %v200, %v204
    %v207 = vshrl.u32 %v109, 16
    %v209 = vrot.slane %v207, 4
    %v210 = vshll.u32 %v109, 16
    %v212 = vrot.slane %v210, 5
    %v213 = vor.u32 %v209, %v212
    %v214 = vrot.slane %v213, 4
    %v216 = vshll.u32 %v110, 16
    %v218 = vrot.slane %v216, 5
    %v219 = vsel %vm133, %v214, %v218
    %v220 = vshrl.u32 %v110, 16
    %v222 = vrot.slane %v220, 4
    %v223 = vor.u32 %v222, %v218
    %v224 = vrot.slane %v223, 4
    %v226 = vshll.u32 %v126, 16
    %v228 = vrot.slane %v226, 5
    %v229 = vsel %vm133, %v224, %v228
    %v231 = vshrl.u32 %v111, 16
    %v233 = vrot.slane %v231, 4
    %v234 = vshll.u32 %v111, 16
    %v236 = vrot.slane %v234, 5
    %v237 = vor.u32 %v233, %v236
    %v238 = vrot.slane %v237, 4
    %v240 = vshll.u32 %v112, 16
    %v242 = vrot.slane %v240, 5
    %v243 = vsel %vm133, %v238, %v242
    %v244 = vshrl.u32 %v112, 16
    %v246 = vrot.slane %v244, 4
    %v247 = vor.u32 %v246, %v242
    %v248 = vrot.slane %v247, 4
    %v250 = vshll.u32 %v127, 16
    %v252 = vrot.slane %v250, 5
    %v253 = vsel %vm133, %v248, %v252
    %v255 = vshrl.u32 %v113, 16
    %v257 = vrot.slane %v255, 4
    %v258 = vshll.u32 %v113, 16
    %v260 = vrot.slane %v258, 5
    %v261 = vor.u32 %v257, %v260
    %v262 = vrot.slane %v261, 4
    %v264 = vshll.u32 %v114, 16
    %v266 = vrot.slane %v264, 5
    %v267 = vsel %vm133, %v262, %v266
    %v268 = vshrl.u32 %v114, 16
    %v270 = vrot.slane %v268, 4
    %v271 = vor.u32 %v270, %v266
    %v272 = vrot.slane %v271, 4
    %v274 = vshll.u32 %v128, 16
    %v276 = vrot.slane %v274, 5
    %v277 = vsel %vm133, %v272, %v276
    %v279 = vshrl.u32 %v115, 16
    %v281 = vrot.slane %v279, 4
    %v282 = vshll.u32 %v115, 16
    %v284 = vrot.slane %v282, 5
    %v285 = vor.u32 %v281, %v284
    %v286 = vrot.slane %v285, 4
    %v288 = vshll.u32 %v116, 16
    %v290 = vrot.slane %v288, 5
    %v291 = vsel %vm133, %v286, %v290
    %v292 = vshrl.u32 %v116, 16
    %v294 = vrot.slane %v292, 4
    %v295 = vor.u32 %v294, %v290
    %v296 = vrot.slane %v295, 4
    %v298 = vshll.u32 %v129, 16
    %v300 = vrot.slane %v298, 5
    %v301 = vsel %vm133, %v296, %v300
    %v303 = vshrl.u32 %v117, 16
    %v305 = vrot.slane %v303, 4
    %v306 = vshll.u32 %v117, 16
    %v308 = vrot.slane %v306, 5
    %v309 = vor.u32 %v305, %v308
    %v310 = vrot.slane %v309, 4
    %v312 = vshll.u32 %v118, 16
    %v314 = vrot.slane %v312, 5
    %v315 = vsel %vm133, %v310, %v314
    %v316 = vshrl.u32 %v118, 16
    %v318 = vrot.slane %v316, 4
    %v319 = vor.u32 %v318, %v314
    %v320 = vrot.slane %v319, 4
    %v322 = vshll.u32 %v130, 16
    %v324 = vrot.slane %v322, 5
    %v325 = vsel %vm133, %v320, %v324
    %s326 = scalar_lea.vmem [#allocation5], 16
    %v327 = vld [vmem:[%s326] sm:$0xf]
    %v328 = vld [vmem:[%s326 + $0x4] sm:$0xf]
    %v329 = vld [vmem:[%s326 + $0x8] sm:$0xf]
    %v330 = vld [vmem:[%s326 + $0xc] sm:$0xf]
    %v331 = vunpack.c.l.b16 %v147
    %v332 = vunpack.c.l.b16 %v157
    %v333 = vunpack.c.l.b16 %v171
    %v334 = vunpack.c.l.b16 %v181
    %v335 = vunpack.c.l.b16 %v195
    %v336 = vunpack.c.l.b16 %v205
    %v337 = vunpack.c.l.b16 %v219
    %v338 = vunpack.c.l.b16 %v229
    %v339 = vunpack.c.l.b16 %v243
    %v340 = vunpack.c.l.b16 %v253
    %v341 = vunpack.c.l.b16 %v267
    %v342 = vunpack.c.l.b16 %v277
    %v343 = vunpack.c.l.b16 %v291
    %v344 = vunpack.c.l.b16 %v301
    %v345 = vunpack.c.l.b16 %v315
    %v346 = vunpack.c.l.b16 %v325
    %v347 = vpack.c.b16 %v332, %v331
    %v348 = vpack.c.b16 %v334, %v333
    %v349 = vpack.c.b16 %v336, %v335
    %v350 = vpack.c.b16 %v338, %v337
    %v351 = vpack.c.b16 %v340, %v339
    %v352 = vpack.c.b16 %v342, %v341
    %v353 = vpack.c.b16 %v344, %v343
    %v354 = vpack.c.b16 %v346, %v345
    %v359 = vunpack.c.l.b16 %v327
    %v360 = vunpack.c.l.b16 %v328
    %v361 = vunpack.c.l.b16 %v329
    %v362 = vunpack.c.l.b16 %v330
    %v363 = vpack.c.b16 %v360, %v359
    %v364 = vpack.c.b16 %v362, %v361
    %vm367 = vcmask 261120
    %v369 = vsel %vm367, %v347, 0
    %v372 = vsel %vm367, %v348, 0
    %v375 = vsel %vm367, %v349, 0
    %v378 = vsel %vm367, %v350, 0
    %v381 = vsel %vm367, %v351, 0
    %v384 = vsel %vm367, %v352, 0
    %v387 = vsel %vm367, %v353, 0
    %v390 = vsel %vm367, %v354, 0
    %392 = vmatprep.subr.bf16.mxu0 0
    %393 = vmatpush1.bf16.msra.mxu0 %v363
    %394 = vmatprep.subr.bf16.mxu0 0
    %395 = vmatpush1.bf16.msra.mxu0 %v364
    %396 = vmatprep.subr.bf16.mxu0 0
    %397 = vmatpush1.bf16.msra.mxu0 0
    %398 = vmatprep.subr.bf16.mxu0 0
    %399 = vmatpush1.bf16.msra.mxu0 0
    %400 = vmatprep.subr.bf16.mxu0 0
    %401 = vmatpush1.bf16.msra.mxu0 0
    %402 = vmatprep.subr.bf16.mxu0 0
    %403 = vmatpush1.bf16.msra.mxu0 0
    %404 = vmatprep.subr.bf16.mxu0 0
    %405 = vmatpush1.bf16.msra.mxu0 0
    %406 = vmatprep.subr.bf16.mxu0 0
    %407 = vmatpush1.bf16.msra.mxu0 0
    %408 = vmatprep.subr.bf16.mxu0 0
    %409 = vmatpush1.bf16.msra.mxu0 0
    %410 = vmatprep.subr.bf16.mxu0 0
    %411 = vmatpush1.bf16.msra.mxu0 0
    %412 = vmatprep.subr.bf16.mxu0 0
    %413 = vmatpush1.bf16.msra.mxu0 0
    %414 = vmatprep.subr.bf16.mxu0 0
    %415 = vmatpush1.bf16.msra.mxu0 0
    %416 = vmatprep.subr.bf16.mxu0 0
    %417 = vmatpush1.bf16.msra.mxu0 0
    %418 = vmatprep.subr.bf16.mxu0 0
    %419 = vmatpush1.bf16.msra.mxu0 0
    %420 = vmatprep.subr.bf16.mxu0 0
    %421 = vmatpush1.bf16.msra.mxu0 0
    %422 = vmatprep.subr.bf16.mxu0 0
    %423 = vmatpush1.bf16.msra.mxu0 0
    %424 = vmatprep.mubr.bf16.mxu0 0
    %425 = vmatmul.mubr.bf16.gmra.mrb[0].mxu0 %v369
    %v426 = vpop.f32.mrb[0].mxu0
    %v427 = vadd.f32 0.0, %v426
    %v428 = vpop.f32.mrb[0].mxu0
    %v429 = vpop.f32.mrb[0].mxu0
    %v430 = vadd.f32 0.0, %v429
    %v431 = vpop.f32.mrb[0].mxu0
    %432 = vmatprep.mubr.bf16.mxu0 0
    %433 = vmatmul.mubr.bf16.gmra.mrb[0].mxu0 %v372
    %v434 = vpop.f32.mrb[0].mxu0
    %v435 = vadd.f32 0.0, %v434
    %v436 = vpop.f32.mrb[0].mxu0
    %v437 = vpop.f32.mrb[0].mxu0
    %v438 = vadd.f32 0.0, %v437
    %v439 = vpop.f32.mrb[0].mxu0
    %440 = vmatprep.mubr.bf16.mxu0 0
    %441 = vmatmul.mubr.bf16.gmra.mrb[0].mxu0 %v375
    %v442 = vpop.f32.mrb[0].mxu0
    %v443 = vadd.f32 0.0, %v442
    %v444 = vpop.f32.mrb[0].mxu0
    %v445 = vpop.f32.mrb[0].mxu0
    %v446 = vadd.f32 0.0, %v445
    %v447 = vpop.f32.mrb[0].mxu0
    %448 = vmatprep.mubr.bf16.mxu0 0
    %449 = vmatmul.mubr.bf16.gmra.mrb[0].mxu0 %v378
    %v450 = vpop.f32.mrb[0].mxu0
    %v451 = vadd.f32 0.0, %v450
    %v452 = vpop.f32.mrb[0].mxu0
    %v453 = vpop.f32.mrb[0].mxu0
    %v454 = vadd.f32 0.0, %v453
    %v455 = vpop.f32.mrb[0].mxu0
    %456 = vmatprep.mubr.bf16.mxu0 0
    %457 = vmatmul.mubr.bf16.gmra.mrb[0].mxu0 %v381
    %v458 = vpop.f32.mrb[0].mxu0
    %v459 = vadd.f32 0.0, %v458
    %v460 = vpop.f32.mrb[0].mxu0
    %v461 = vpop.f32.mrb[0].mxu0
    %v462 = vadd.f32 0.0, %v461
    %v463 = vpop.f32.mrb[0].mxu0
    %464 = vmatprep.mubr.bf16.mxu0 0
    %465 = vmatmul.mubr.bf16.gmra.mrb[0].mxu0 %v384
    %v466 = vpop.f32.mrb[0].mxu0
    %v467 = vadd.f32 0.0, %v466
    %v468 = vpop.f32.mrb[0].mxu0
    %v469 = vpop.f32.mrb[0].mxu0
    %v470 = vadd.f32 0.0, %v469
    %v471 = vpop.f32.mrb[0].mxu0
    %472 = vmatprep.mubr.bf16.mxu0 0
    %473 = vmatmul.mubr.bf16.gmra.mrb[0].mxu0 %v387
    %v474 = vpop.f32.mrb[0].mxu0
    %v475 = vadd.f32 0.0, %v474
    %v476 = vpop.f32.mrb[0].mxu0
    %v477 = vpop.f32.mrb[0].mxu0
    %v478 = vadd.f32 0.0, %v477
    %v479 = vpop.f32.mrb[0].mxu0
    %480 = vmatprep.mubr.bf16.mxu0 0
    %481 = vmatmul.mubr.bf16.gmra.mrb[0].mxu0 %v390
    %v482 = vpop.f32.mrb[0].mxu0
    %v483 = vadd.f32 0.0, %v482
    %v484 = vpop.f32.mrb[0].mxu0
    %v485 = vpop.f32.mrb[0].mxu0
    %v486 = vadd.f32 0.0, %v485
    %v487 = vpop.f32.mrb[0].mxu0
    %488 = vdwg.mxu0
    %v505 = vunpack.c.l.b16 %v103
    %v506 = vunpack.c.l.b16 %v104
    %v507 = vunpack.c.l.b16 %v105
    %v508 = vunpack.c.l.b16 %v106
    %v509 = vunpack.c.l.b16 %v107
    %v510 = vunpack.c.l.b16 %v108
    %v511 = vunpack.c.l.b16 %v109
    %v512 = vunpack.c.l.b16 %v110
    %v513 = vunpack.c.l.b16 %v111
    %v514 = vunpack.c.l.b16 %v112
    %v515 = vunpack.c.l.b16 %v113
    %v516 = vunpack.c.l.b16 %v114
    %v517 = vunpack.c.l.b16 %v115
    %v518 = vunpack.c.l.b16 %v116
    %v519 = vunpack.c.l.b16 %v117
    %v520 = vunpack.c.l.b16 %v118
    %v521 = vpack.c.b16 %v506, %v505
    %v522 = vpack.c.b16 %v508, %v507
    %v523 = vpack.c.b16 %v510, %v509
    %v524 = vpack.c.b16 %v512, %v511
    %v525 = vpack.c.b16 %v514, %v513
    %v526 = vpack.c.b16 %v516, %v515
    %v527 = vpack.c.b16 %v518, %v517
    %v528 = vpack.c.b16 %v520, %v519
    %v533 = vunpack.c.l.b16 %v119
    %v534 = vunpack.c.l.b16 %v120
    %v535 = vunpack.c.l.b16 %v121
    %v536 = vunpack.c.l.b16 %v122
    %v537 = vpack.c.b16 %v534, %v533
    %v538 = vpack.c.b16 %v536, %v535
    %v542 = vsel %vm367, %v521, 0
    %v545 = vsel %vm367, %v522, 0
    %v548 = vsel %vm367, %v523, 0
    %v551 = vsel %vm367, %v524, 0
    %v554 = vsel %vm367, %v525, 0
    %v557 = vsel %vm367, %v526, 0
    %v560 = vsel %vm367, %v527, 0
    %v563 = vsel %vm367, %v528, 0
    %565 = vmatprep.subr.bf16.mxu0 0
    %566 = vmatpush1.bf16.msra.mxu0 %v537
    %567 = vmatprep.subr.bf16.mxu0 0
    %568 = vmatpush1.bf16.msra.mxu0 %v538
    %569 = vmatprep.subr.bf16.mxu0 0
    %570 = vmatpush1.bf16.msra.mxu0 0
    %571 = vmatprep.subr.bf16.mxu0 0
    %572 = vmatpush1.bf16.msra.mxu0 0
    %573 = vmatprep.subr.bf16.mxu0 0
    %574 = vmatpush1.bf16.msra.mxu0 0
    %575 = vmatprep.subr.bf16.mxu0 0
    %576 = vmatpush1.bf16.msra.mxu0 0
    %577 = vmatprep.subr.bf16.mxu0 0
    %578 = vmatpush1.bf16.msra.mxu0 0
    %579 = vmatprep.subr.bf16.mxu0 0
    %580 = vmatpush1.bf16.msra.mxu0 0
    %581 = vmatprep.subr.bf16.mxu0 0
    %582 = vmatpush1.bf16.msra.mxu0 0
    %583 = vmatprep.subr.bf16.mxu0 0
    %584 = vmatpush1.bf16.msra.mxu0 0
    %585 = vmatprep.subr.bf16.mxu0 0
    %586 = vmatpush1.bf16.msra.mxu0 0
    %587 = vmatprep.subr.bf16.mxu0 0
    %588 = vmatpush1.bf16.msra.mxu0 0
    %589 = vmatprep.subr.bf16.mxu0 0
    %590 = vmatpush1.bf16.msra.mxu0 0
    %591 = vmatprep.subr.bf16.mxu0 0
    %592 = vmatpush1.bf16.msra.mxu0 0
    %593 = vmatprep.subr.bf16.mxu0 0
    %594 = vmatpush1.bf16.msra.mxu0 0
    %595 = vmatprep.subr.bf16.mxu0 0
    %596 = vmatpush1.bf16.msra.mxu0 0
    %597 = vmatprep.mubr.bf16.mxu0 0
    %598 = vmatmul.mubr.bf16.gmra.mrb[0].mxu0 %v542
    %v599 = vpop.f32.mrb[0].mxu0
    %v600 = vadd.f32 %v427, %v599
    %v601 = vpop.f32.mrb[0].mxu0
    %v602 = vpop.f32.mrb[0].mxu0
    %v603 = vadd.f32 %v430, %v602
    %v604 = vpop.f32.mrb[0].mxu0
    %605 = vmatprep.mubr.bf16.mxu0 0
    %606 = vmatmul.mubr.bf16.gmra.mrb[0].mxu0 %v545
    %v607 = vpop.f32.mrb[0].mxu0
    %v608 = vadd.f32 %v435, %v607
    %v609 = vpop.f32.mrb[0].mxu0
    %v610 = vpop.f32.mrb[0].mxu0
    %v611 = vadd.f32 %v438, %v610
    %v612 = vpop.f32.mrb[0].mxu0
    %613 = vmatprep.mubr.bf16.mxu0 0
    %614 = vmatmul.mubr.bf16.gmra.mrb[0].mxu0 %v548
    %v615 = vpop.f32.mrb[0].mxu0
    %v616 = vadd.f32 %v443, %v615
    %v617 = vpop.f32.mrb[0].mxu0
    %v618 = vpop.f32.mrb[0].mxu0
    %v619 = vadd.f32 %v446, %v618
    %v620 = vpop.f32.mrb[0].mxu0
    %621 = vmatprep.mubr.bf16.mxu0 0
    %622 = vmatmul.mubr.bf16.gmra.mrb[0].mxu0 %v551
    %v623 = vpop.f32.mrb[0].mxu0
    %v624 = vadd.f32 %v451, %v623
    %v625 = vpop.f32.mrb[0].mxu0
    %v626 = vpop.f32.mrb[0].mxu0
    %v627 = vadd.f32 %v454, %v626
    %v628 = vpop.f32.mrb[0].mxu0
    %629 = vmatprep.mubr.bf16.mxu0 0
    %630 = vmatmul.mubr.bf16.gmra.mrb[0].mxu0 %v554
    %v631 = vpop.f32.mrb[0].mxu0
    %v632 = vadd.f32 %v459, %v631
    %v633 = vpop.f32.mrb[0].mxu0
    %v634 = vpop.f32.mrb[0].mxu0
    %v635 = vadd.f32 %v462, %v634
    %v636 = vpop.f32.mrb[0].mxu0
    %637 = vmatprep.mubr.bf16.mxu0 0
    %638 = vmatmul.mubr.bf16.gmra.mrb[0].mxu0 %v557
    %v639 = vpop.f32.mrb[0].mxu0
    %v640 = vadd.f32 %v467, %v639
    %v641 = vpop.f32.mrb[0].mxu0
    %v642 = vpop.f32.mrb[0].mxu0
    %v643 = vadd.f32 %v470, %v642
    %v644 = vpop.f32.mrb[0].mxu0
    %645 = vmatprep.mubr.bf16.mxu0 0
    %646 = vmatmul.mubr.bf16.gmra.mrb[0].mxu0 %v560
    %v647 = vpop.f32.mrb[0].mxu0
    %v648 = vadd.f32 %v475, %v647
    %v649 = vpop.f32.mrb[0].mxu0
    %v650 = vpop.f32.mrb[0].mxu0
    %v651 = vadd.f32 %v478, %v650
    %v652 = vpop.f32.mrb[0].mxu0
    %653 = vmatprep.mubr.bf16.mxu0 0
    %654 = vmatmul.mubr.bf16.gmra.mrb[0].mxu0 %v563
    %v655 = vpop.f32.mrb[0].mxu0
    %v656 = vadd.f32 %v483, %v655
    %v657 = vpop.f32.mrb[0].mxu0
    %v658 = vpop.f32.mrb[0].mxu0
    %v659 = vadd.f32 %v486, %v658
    %v660 = vpop.f32.mrb[0].mxu0
    %661 = vdwg.mxu0
    %v662 = vld [vmem:[#allocation2] sm:$0xe]
    %v663 = vld [vmem:[#allocation2 + $0xc] sm:$0xe]
    %v664 = vld [vmem:[#allocation2 + $0x18] sm:$0xe]
    %v665 = vld [vmem:[#allocation2 + $0x24] sm:$0xe]
    %v666 = vld [vmem:[#allocation2 + $0x30] sm:$0xe]
    %v667 = vld [vmem:[#allocation2 + $0x3c] sm:$0xe]
    %v668 = vld [vmem:[#allocation2 + $0x48] sm:$0xe]
    %v669 = vld [vmem:[#allocation2 + $0x54] sm:$0xe]
    %vm686 = vcmask 1042432
    %vm687 = vcmask 1046532
    %vm688 = vmor %vm686, %vm687
    %v689 = vrot.slane %v662, 5
    %v690 = vrot.slane %v689, 4
    %v691 = vrot.slane %v104, 5
    %v692 = vsel %vm688, %v690, %v691
    %v693 = vrot.slane %v691, 4
    %v694 = vrot.slane %v123, 5
    %v695 = vsel %vm688, %v693, %v694
    %v696 = vrot.slane %v663, 5
    %v697 = vrot.slane %v696, 4
    %v698 = vrot.slane %v106, 5
    %v699 = vsel %vm688, %v697, %v698
    %v700 = vrot.slane %v698, 4
    %v701 = vrot.slane %v124, 5
    %v702 = vsel %vm688, %v700, %v701
    %v703 = vrot.slane %v664, 5
    %v704 = vrot.slane %v703, 4
    %v705 = vrot.slane %v108, 5
    %v706 = vsel %vm688, %v704, %v705
    %v707 = vrot.slane %v705, 4
    %v708 = vrot.slane %v125, 5
    %v709 = vsel %vm688, %v707, %v708
    %v710 = vrot.slane %v665, 5
    %v711 = vrot.slane %v710, 4
    %v712 = vrot.slane %v110, 5
    %v713 = vsel %vm688, %v711, %v712
    %v714 = vrot.slane %v712, 4
    %v715 = vrot.slane %v126, 5
    %v716 = vsel %vm688, %v714, %v715
    %v717 = vrot.slane %v666, 5
    %v718 = vrot.slane %v717, 4
    %v719 = vrot.slane %v112, 5
    %v720 = vsel %vm688, %v718, %v719
    %v721 = vrot.slane %v719, 4
    %v722 = vrot.slane %v127, 5
    %v723 = vsel %vm688, %v721, %v722
    %v724 = vrot.slane %v667, 5
    %v725 = vrot.slane %v724, 4
    %v726 = vrot.slane %v114, 5
    %v727 = vsel %vm688, %v725, %v726
    %v728 = vrot.slane %v726, 4
    %v729 = vrot.slane %v128, 5
    %v730 = vsel %vm688, %v728, %v729
    %v731 = vrot.slane %v668, 5
    %v732 = vrot.slane %v731, 4
    %v733 = vrot.slane %v116, 5
    %v734 = vsel %vm688, %v732, %v733
    %v735 = vrot.slane %v733, 4
    %v736 = vrot.slane %v129, 5
    %v737 = vsel %vm688, %v735, %v736
    %v738 = vrot.slane %v669, 5
    %v739 = vrot.slane %v738, 4
    %v740 = vrot.slane %v118, 5
    %v741 = vsel %vm688, %v739, %v740
    %v742 = vrot.slane %v740, 4
    %v743 = vrot.slane %v130, 5
    %v744 = vsel %vm688, %v742, %v743
    %s745 = scalar_lea.vmem [#allocation5], 32
    %v746 = vld [vmem:[%s745] sm:$0xf]
    %v747 = vld [vmem:[%s745 + $0x4] sm:$0xf]
    %v748 = vld [vmem:[%s745 + $0x8] sm:$0xf]
    %v749 = vld [vmem:[%s745 + $0xc] sm:$0xf]
    %v750 = vunpack.c.l.b16 %v692
    %v751 = vunpack.c.l.b16 %v695
    %v752 = vunpack.c.l.b16 %v699
    %v753 = vunpack.c.l.b16 %v702
    %v754 = vunpack.c.l.b16 %v706
    %v755 = vunpack.c.l.b16 %v709
    %v756 = vunpack.c.l.b16 %v713
    %v757 = vunpack.c.l.b16 %v716
    %v758 = vunpack.c.l.b16 %v720
    %v759 = vunpack.c.l.b16 %v723
    %v760 = vunpack.c.l.b16 %v727
    %v761 = vunpack.c.l.b16 %v730
    %v762 = vunpack.c.l.b16 %v734
    %v763 = vunpack.c.l.b16 %v737
    %v764 = vunpack.c.l.b16 %v741
    %v765 = vunpack.c.l.b16 %v744
    %v766 = vpack.c.b16 %v751, %v750
    %v767 = vpack.c.b16 %v753, %v752
    %v768 = vpack.c.b16 %v755, %v754
    %v769 = vpack.c.b16 %v757, %v756
    %v770 = vpack.c.b16 %v759, %v758
    %v771 = vpack.c.b16 %v761, %v760
    %v772 = vpack.c.b16 %v763, %v762
    %v773 = vpack.c.b16 %v765, %v764
    %v778 = vunpack.c.l.b16 %v746
    %v779 = vunpack.c.l.b16 %v747
    %v780 = vunpack.c.l.b16 %v748
    %v781 = vunpack.c.l.b16 %v749
    %v782 = vpack.c.b16 %v779, %v778
    %v783 = vpack.c.b16 %v781, %v780
    %v787 = vsel %vm367, %v766, 0
    %v790 = vsel %vm367, %v767, 0
    %v793 = vsel %vm367, %v768, 0
    %v796 = vsel %vm367, %v769, 0
    %v799 = vsel %vm367, %v770, 0
    %v802 = vsel %vm367, %v771, 0
    %v805 = vsel %vm367, %v772, 0
    %v808 = vsel %vm367, %v773, 0
    %810 = vmatprep.subr.bf16.mxu0 0
    %811 = vmatpush1.bf16.msra.mxu0 %v782
    %812 = vmatprep.subr.bf16.mxu0 0
    %813 = vmatpush1.bf16.msra.mxu0 %v783
    %814 = vmatprep.subr.bf16.mxu0 0
    %815 = vmatpush1.bf16.msra.mxu0 0
    %816 = vmatprep.subr.bf16.mxu0 0
    %817 = vmatpush1.bf16.msra.mxu0 0
    %818 = vmatprep.subr.bf16.mxu0 0
    %819 = vmatpush1.bf16.msra.mxu0 0
    %820 = vmatprep.subr.bf16.mxu0 0
    %821 = vmatpush1.bf16.msra.mxu0 0
    %822 = vmatprep.subr.bf16.mxu0 0
    %823 = vmatpush1.bf16.msra.mxu0 0
    %824 = vmatprep.subr.bf16.mxu0 0
    %825 = vmatpush1.bf16.msra.mxu0 0
    %826 = vmatprep.subr.bf16.mxu0 0
    %827 = vmatpush1.bf16.msra.mxu0 0
    %828 = vmatprep.subr.bf16.mxu0 0
    %829 = vmatpush1.bf16.msra.mxu0 0
    %830 = vmatprep.subr.bf16.mxu0 0
    %831 = vmatpush1.bf16.msra.mxu0 0
    %832 = vmatprep.subr.bf16.mxu0 0
    %833 = vmatpush1.bf16.msra.mxu0 0
    %834 = vmatprep.subr.bf16.mxu0 0
    %835 = vmatpush1.bf16.msra.mxu0 0
    %836 = vmatprep.subr.bf16.mxu0 0
    %837 = vmatpush1.bf16.msra.mxu0 0
    %838 = vmatprep.subr.bf16.mxu0 0
    %839 = vmatpush1.bf16.msra.mxu0 0
    %840 = vmatprep.subr.bf16.mxu0 0
    %841 = vmatpush1.bf16.msra.mxu0 0
    %842 = vmatprep.mubr.bf16.mxu0 0
    %843 = vmatmul.mubr.bf16.gmra.mrb[0].mxu0 %v787
    %v844 = vpop.f32.mrb[0].mxu0
    %v845 = vadd.f32 0.0, %v844
    %v846 = vpop.f32.mrb[0].mxu0
    %v847 = vpop.f32.mrb[0].mxu0
    %v848 = vadd.f32 0.0, %v847
    %v849 = vpop.f32.mrb[0].mxu0
    %850 = vmatprep.mubr.bf16.mxu0 0
    %851 = vmatmul.mubr.bf16.gmra.mrb[0].mxu0 %v790
    %v852 = vpop.f32.mrb[0].mxu0
    %v853 = vadd.f32 0.0, %v852
    %v854 = vpop.f32.mrb[0].mxu0
    %v855 = vpop.f32.mrb[0].mxu0
    %v856 = vadd.f32 0.0, %v855
    %v857 = vpop.f32.mrb[0].mxu0
    %858 = vmatprep.mubr.bf16.mxu0 0
    %859 = vmatmul.mubr.bf16.gmra.mrb[0].mxu0 %v793
    %v860 = vpop.f32.mrb[0].mxu0
    %v861 = vadd.f32 0.0, %v860
    %v862 = vpop.f32.mrb[0].mxu0
    %v863 = vpop.f32.mrb[0].mxu0
    %v864 = vadd.f32 0.0, %v863
    %v865 = vpop.f32.mrb[0].mxu0
    %866 = vmatprep.mubr.bf16.mxu0 0
    %867 = vmatmul.mubr.bf16.gmra.mrb[0].mxu0 %v796
    %v868 = vpop.f32.mrb[0].mxu0
    %v869 = vadd.f32 0.0, %v868
    %v870 = vpop.f32.mrb[0].mxu0
    %v871 = vpop.f32.mrb[0].mxu0
    %v872 = vadd.f32 0.0, %v871
    %v873 = vpop.f32.mrb[0].mxu0
    %874 = vmatprep.mubr.bf16.mxu0 0
    %875 = vmatmul.mubr.bf16.gmra.mrb[0].mxu0 %v799
    %v876 = vpop.f32.mrb[0].mxu0
    %v877 = vadd.f32 0.0, %v876
    %v878 = vpop.f32.mrb[0].mxu0
    %v879 = vpop.f32.mrb[0].mxu0
    %v880 = vadd.f32 0.0, %v879
    %v881 = vpop.f32.mrb[0].mxu0
    %882 = vmatprep.mubr.bf16.mxu0 0
    %883 = vmatmul.mubr.bf16.gmra.mrb[0].mxu0 %v802
    %v884 = vpop.f32.mrb[0].mxu0
    %v885 = vadd.f32 0.0, %v884
    %v886 = vpop.f32.mrb[0].mxu0
    %v887 = vpop.f32.mrb[0].mxu0
    %v888 = vadd.f32 0.0, %v887
    %v889 = vpop.f32.mrb[0].mxu0
    %890 = vmatprep.mubr.bf16.mxu0 0
    %891 = vmatmul.mubr.bf16.gmra.mrb[0].mxu0 %v805
    %v892 = vpop.f32.mrb[0].mxu0
    %v893 = vadd.f32 0.0, %v892
    %v894 = vpop.f32.mrb[0].mxu0
    %v895 = vpop.f32.mrb[0].mxu0
    %v896 = vadd.f32 0.0, %v895
    %v897 = vpop.f32.mrb[0].mxu0
    %898 = vmatprep.mubr.bf16.mxu0 0
    %899 = vmatmul.mubr.bf16.gmra.mrb[0].mxu0 %v808
    %v900 = vpop.f32.mrb[0].mxu0
    %v901 = vadd.f32 0.0, %v900
    %v902 = vpop.f32.mrb[0].mxu0
    %v903 = vpop.f32.mrb[0].mxu0
    %v904 = vadd.f32 0.0, %v903
    %v905 = vpop.f32.mrb[0].mxu0
    %906 = vdwg.mxu0
    %v907 = vadd.f32 %v600, %v845
    %v908 = vadd.f32 %v603, %v848
    %v909 = vadd.f32 %v608, %v853
    %v910 = vadd.f32 %v611, %v856
    %v911 = vadd.f32 %v616, %v861
    %v912 = vadd.f32 %v619, %v864
    %v913 = vadd.f32 %v624, %v869
    %v914 = vadd.f32 %v627, %v872
    %v915 = vadd.f32 %v632, %v877
    %v916 = vadd.f32 %v635, %v880
    %v917 = vadd.f32 %v640, %v885
    %v918 = vadd.f32 %v643, %v888
    %v919 = vadd.f32 %v648, %v893
    %v920 = vadd.f32 %v651, %v896
    %v921 = vadd.f32 %v656, %v901
    %v922 = vadd.f32 %v659, %v904
    %v923 = vld [vmem:[#allocation2 + $0x8] sm:$0x3]
    %v924 = vld [vmem:[#allocation2 + $0x14] sm:$0x3]
    %v925 = vld [vmem:[#allocation2 + $0x20] sm:$0x3]
    %v926 = vld [vmem:[#allocation2 + $0x2c] sm:$0x3]
    %v927 = vld [vmem:[#allocation2 + $0x38] sm:$0x3]
    %v928 = vld [vmem:[#allocation2 + $0x44] sm:$0x3]
    %v929 = vld [vmem:[#allocation2 + $0x50] sm:$0x3]
    %v930 = vld [vmem:[#allocation2 + $0x5c] sm:$0x3]
    %vm931 = vsmask.f32 2304
    %vm932 = vsmask.f32 6416
    %vm933 = vmor %vm931, %vm932
    %v935 = vshrl.u32 %v662, 16
    %v937 = vrot.slane %v935, 5
    %v938 = vshll.u32 %v662, 16
    %v940 = vrot.slane %v938, 6
    %v941 = vor.u32 %v937, %v940
    %v942 = vrot.slane %v941, 4
    %v943 = vrot.slane %v148, 5
    %v944 = vrot.slane %v144, 6
    %v945 = vor.u32 %v943, %v944
    %v946 = vsel %vm933, %v942, %v945
    %v947 = vrot.slane %v945, 4
    %v949 = vshrl.u32 %v923, 16
    %v951 = vrot.slane %v949, 5
    %v952 = vshll.u32 %v923, 16
    %v954 = vrot.slane %v952, 6
    %v955 = vor.u32 %v951, %v954
    %v956 = vsel %vm933, %v947, %v955
    %v958 = vshrl.u32 %v663, 16
    %v960 = vrot.slane %v958, 5
    %v961 = vshll.u32 %v663, 16
    %v963 = vrot.slane %v961, 6
    %v964 = vor.u32 %v960, %v963
    %v965 = vrot.slane %v964, 4
    %v966 = vrot.slane %v172, 5
    %v967 = vrot.slane %v168, 6
    %v968 = vor.u32 %v966, %v967
    %v969 = vsel %vm933, %v965, %v968
    %v970 = vrot.slane %v968, 4
    %v972 = vshrl.u32 %v924, 16
    %v974 = vrot.slane %v972, 5
    %v975 = vshll.u32 %v924, 16
    %v977 = vrot.slane %v975, 6
    %v978 = vor.u32 %v974, %v977
    %v979 = vsel %vm933, %v970, %v978
    %v981 = vshrl.u32 %v664, 16
    %v983 = vrot.slane %v981, 5
    %v984 = vshll.u32 %v664, 16
    %v986 = vrot.slane %v984, 6
    %v987 = vor.u32 %v983, %v986
    %v988 = vrot.slane %v987, 4
    %v989 = vrot.slane %v196, 5
    %v990 = vrot.slane %v192, 6
    %v991 = vor.u32 %v989, %v990
    %v992 = vsel %vm933, %v988, %v991
    %v993 = vrot.slane %v991, 4
    %v995 = vshrl.u32 %v925, 16
    %v997 = vrot.slane %v995, 5
    %v998 = vshll.u32 %v925, 16
    %v1000 = vrot.slane %v998, 6
    %v1001 = vor.u32 %v997, %v1000
    %v1002 = vsel %vm933, %v993, %v1001
    %v1004 = vshrl.u32 %v665, 16
    %v1006 = vrot.slane %v1004, 5
    %v1007 = vshll.u32 %v665, 16
    %v1009 = vrot.slane %v1007, 6
    %v1010 = vor.u32 %v1006, %v1009
    %v1011 = vrot.slane %v1010, 4
    %v1012 = vrot.slane %v220, 5
    %v1013 = vrot.slane %v216, 6
    %v1014 = vor.u32 %v1012, %v1013
    %v1015 = vsel %vm933, %v1011, %v1014
    %v1016 = vrot.slane %v1014, 4
    %v1018 = vshrl.u32 %v926, 16
    %v1020 = vrot.slane %v1018, 5
    %v1021 = vshll.u32 %v926, 16
    %v1023 = vrot.slane %v1021, 6
    %v1024 = vor.u32 %v1020, %v1023
    %v1025 = vsel %vm933, %v1016, %v1024
    %v1027 = vshrl.u32 %v666, 16
    %v1029 = vrot.slane %v1027, 5
    %v1030 = vshll.u32 %v666, 16
    %v1032 = vrot.slane %v1030, 6
    %v1033 = vor.u32 %v1029, %v1032
    %v1034 = vrot.slane %v1033, 4
    %v1035 = vrot.slane %v244, 5
    %v1036 = vrot.slane %v240, 6
    %v1037 = vor.u32 %v1035, %v1036
    %v1038 = vsel %vm933, %v1034, %v1037
    %v1039 = vrot.slane %v1037, 4
    %v1041 = vshrl.u32 %v927, 16
    %v1043 = vrot.slane %v1041, 5
    %v1044 = vshll.u32 %v927, 16
    %v1046 = vrot.slane %v1044, 6
    %v1047 = vor.u32 %v1043, %v1046
    %v1048 = vsel %vm933, %v1039, %v1047
    %v1050 = vshrl.u32 %v667, 16
    %v1052 = vrot.slane %v1050, 5
    %v1053 = vshll.u32 %v667, 16
    %v1055 = vrot.slane %v1053, 6
    %v1056 = vor.u32 %v1052, %v1055
    %v1057 = vrot.slane %v1056, 4
    %v1058 = vrot.slane %v268, 5
    %v1059 = vrot.slane %v264, 6
    %v1060 = vor.u32 %v1058, %v1059
    %v1061 = vsel %vm933, %v1057, %v1060
    %v1062 = vrot.slane %v1060, 4
    %v1064 = vshrl.u32 %v928, 16
    %v1066 = vrot.slane %v1064, 5
    %v1067 = vshll.u32 %v928, 16
    %v1069 = vrot.slane %v1067, 6
    %v1070 = vor.u32 %v1066, %v1069
    %v1071 = vsel %vm933, %v1062, %v1070
    %v1073 = vshrl.u32 %v668, 16
    %v1075 = vrot.slane %v1073, 5
    %v1076 = vshll.u32 %v668, 16
    %v1078 = vrot.slane %v1076, 6
    %v1079 = vor.u32 %v1075, %v1078
    %v1080 = vrot.slane %v1079, 4
    %v1081 = vrot.slane %v292, 5
    %v1082 = vrot.slane %v288, 6
    %v1083 = vor.u32 %v1081, %v1082
    %v1084 = vsel %vm933, %v1080, %v1083
    %v1085 = vrot.slane %v1083, 4
    %v1087 = vshrl.u32 %v929, 16
    %v1089 = vrot.slane %v1087, 5
    %v1090 = vshll.u32 %v929, 16
    %v1092 = vrot.slane %v1090, 6
    %v1093 = vor.u32 %v1089, %v1092
    %v1094 = vsel %vm933, %v1085, %v1093
    %v1096 = vshrl.u32 %v669, 16
    %v1098 = vrot.slane %v1096, 5
    %v1099 = vshll.u32 %v669, 16
    %v1101 = vrot.slane %v1099, 6
    %v1102 = vor.u32 %v1098, %v1101
    %v1103 = vrot.slane %v1102, 4
    %v1104 = vrot.slane %v316, 5
    %v1105 = vrot.slane %v312, 6
    %v1106 = vor.u32 %v1104, %v1105
    %v1107 = vsel %vm933, %v1103, %v1106
    %v1108 = vrot.slane %v1106, 4
    %v1110 = vshrl.u32 %v930, 16
    %v1112 = vrot.slane %v1110, 5
    %v1113 = vshll.u32 %v930, 16
    %v1115 = vrot.slane %v1113, 6
    %v1116 = vor.u32 %v1112, %v1115
    %v1117 = vsel %vm933, %v1108, %v1116
    %s1118 = scalar_lea.vmem [#allocation5], 48
    %v1119 = vld [vmem:[%s1118] sm:$0xf]
    %v1120 = vld [vmem:[%s1118 + $0x4] sm:$0xf]
    %v1121 = vld [vmem:[%s1118 + $0x8] sm:$0xf]
    %v1122 = vld [vmem:[%s1118 + $0xc] sm:$0xf]
    %v1123 = vunpack.c.l.b16 %v946
    %v1124 = vunpack.c.l.b16 %v956
    %v1125 = vunpack.c.l.b16 %v969
    %v1126 = vunpack.c.l.b16 %v979
    %v1127 = vunpack.c.l.b16 %v992
    %v1128 = vunpack.c.l.b16 %v1002
    %v1129 = vunpack.c.l.b16 %v1015
    %v1130 = vunpack.c.l.b16 %v1025
    %v1131 = vunpack.c.l.b16 %v1038
    %v1132 = vunpack.c.l.b16 %v1048
    %v1133 = vunpack.c.l.b16 %v1061
    %v1134 = vunpack.c.l.b16 %v1071
    %v1135 = vunpack.c.l.b16 %v1084
    %v1136 = vunpack.c.l.b16 %v1094
    %v1137 = vunpack.c.l.b16 %v1107
    %v1138 = vunpack.c.l.b16 %v1117
    %v1139 = vpack.c.b16 %v1124, %v1123
    %v1140 = vpack.c.b16 %v1126, %v1125
    %v1141 = vpack.c.b16 %v1128, %v1127
    %v1142 = vpack.c.b16 %v1130, %v1129
    %v1143 = vpack.c.b16 %v1132, %v1131
    %v1144 = vpack.c.b16 %v1134, %v1133
    %v1145 = vpack.c.b16 %v1136, %v1135
    %v1146 = vpack.c.b16 %v1138, %v1137
    %v1151 = vunpack.c.l.b16 %v1119
    %v1152 = vunpack.c.l.b16 %v1120
    %v1153 = vunpack.c.l.b16 %v1121
    %v1154 = vunpack.c.l.b16 %v1122
    %v1155 = vpack.c.b16 %v1152, %v1151
    %v1156 = vpack.c.b16 %v1154, %v1153
    %v1160 = vsel %vm367, %v1139, 0
    %v1163 = vsel %vm367, %v1140, 0
    %v1166 = vsel %vm367, %v1141, 0
    %v1169 = vsel %vm367, %v1142, 0
    %v1172 = vsel %vm367, %v1143, 0
    %v1175 = vsel %vm367, %v1144, 0
    %v1178 = vsel %vm367, %v1145, 0
    %v1181 = vsel %vm367, %v1146, 0
    %1183 = vmatprep.subr.bf16.mxu0 0
    %1184 = vmatpush1.bf16.msra.mxu0 %v1155
    %1185 = vmatprep.subr.bf16.mxu0 0
    %1186 = vmatpush1.bf16.msra.mxu0 %v1156
    %1187 = vmatprep.subr.bf16.mxu0 0
    %1188 = vmatpush1.bf16.msra.mxu0 0
    %1189 = vmatprep.subr.bf16.mxu0 0
    %1190 = vmatpush1.bf16.msra.mxu0 0
    %1191 = vmatprep.subr.bf16.mxu0 0
    %1192 = vmatpush1.bf16.msra.mxu0 0
    %1193 = vmatprep.subr.bf16.mxu0 0
    %1194 = vmatpush1.bf16.msra.mxu0 0
    %1195 = vmatprep.subr.bf16.mxu0 0
    %1196 = vmatpush1.bf16.msra.mxu0 0
    %1197 = vmatprep.subr.bf16.mxu0 0
    %1198 = vmatpush1.bf16.msra.mxu0 0
    %1199 = vmatprep.subr.bf16.mxu0 0
    %1200 = vmatpush1.bf16.msra.mxu0 0
    %1201 = vmatprep.subr.bf16.mxu0 0
    %1202 = vmatpush1.bf16.msra.mxu0 0
    %1203 = vmatprep.subr.bf16.mxu0 0
    %1204 = vmatpush1.bf16.msra.mxu0 0
    %1205 = vmatprep.subr.bf16.mxu0 0
    %1206 = vmatpush1.bf16.msra.mxu0 0
    %1207 = vmatprep.subr.bf16.mxu0 0
    %1208 = vmatpush1.bf16.msra.mxu0 0
    %1209 = vmatprep.subr.bf16.mxu0 0
    %1210 = vmatpush1.bf16.msra.mxu0 0
    %1211 = vmatprep.subr.bf16.mxu0 0
    %1212 = vmatpush1.bf16.msra.mxu0 0
    %1213 = vmatprep.subr.bf16.mxu0 0
    %1214 = vmatpush1.bf16.msra.mxu0 0
    %1215 = vmatprep.mubr.bf16.mxu0 0
    %1216 = vmatmul.mubr.bf16.gmra.mrb[0].mxu0 %v1160
    %v1217 = vpop.f32.mrb[0].mxu0
    %v1218 = vadd.f32 0.0, %v1217
    %v1219 = vpop.f32.mrb[0].mxu0
    %v1220 = vpop.f32.mrb[0].mxu0
    %v1221 = vadd.f32 0.0, %v1220
    %v1222 = vpop.f32.mrb[0].mxu0
    %1223 = vmatprep.mubr.bf16.mxu0 0
    %1224 = vmatmul.mubr.bf16.gmra.mrb[0].mxu0 %v1163
    %v1225 = vpop.f32.mrb[0].mxu0
    %v1226 = vadd.f32 0.0, %v1225
    %v1227 = vpop.f32.mrb[0].mxu0
    %v1228 = vpop.f32.mrb[0].mxu0
    %v1229 = vadd.f32 0.0, %v1228
    %v1230 = vpop.f32.mrb[0].mxu0
    %1231 = vmatprep.mubr.bf16.mxu0 0
    %1232 = vmatmul.mubr.bf16.gmra.mrb[0].mxu0 %v1166
    %v1233 = vpop.f32.mrb[0].mxu0
    %v1234 = vadd.f32 0.0, %v1233
    %v1235 = vpop.f32.mrb[0].mxu0
    %v1236 = vpop.f32.mrb[0].mxu0
    %v1237 = vadd.f32 0.0, %v1236
    %v1238 = vpop.f32.mrb[0].mxu0
    %1239 = vmatprep.mubr.bf16.mxu0 0
    %1240 = vmatmul.mubr.bf16.gmra.mrb[0].mxu0 %v1169
    %v1241 = vpop.f32.mrb[0].mxu0
    %v1242 = vadd.f32 0.0, %v1241
    %v1243 = vpop.f32.mrb[0].mxu0
    %v1244 = vpop.f32.mrb[0].mxu0
    %v1245 = vadd.f32 0.0, %v1244
    %v1246 = vpop.f32.mrb[0].mxu0
    %1247 = vmatprep.mubr.bf16.mxu0 0
    %1248 = vmatmul.mubr.bf16.gmra.mrb[0].mxu0 %v1172
    %v1249 = vpop.f32.mrb[0].mxu0
    %v1250 = vadd.f32 0.0, %v1249
    %v1251 = vpop.f32.mrb[0].mxu0
    %v1252 = vpop.f32.mrb[0].mxu0
    %v1253 = vadd.f32 0.0, %v1252
    %v1254 = vpop.f32.mrb[0].mxu0
    %1255 = vmatprep.mubr.bf16.mxu0 0
    %1256 = vmatmul.mubr.bf16.gmra.mrb[0].mxu0 %v1175
    %v1257 = vpop.f32.mrb[0].mxu0
    %v1258 = vadd.f32 0.0, %v1257
    %v1259 = vpop.f32.mrb[0].mxu0
    %v1260 = vpop.f32.mrb[0].mxu0
    %v1261 = vadd.f32 0.0, %v1260
    %v1262 = vpop.f32.mrb[0].mxu0
    %1263 = vmatprep.mubr.bf16.mxu0 0
    %1264 = vmatmul.mubr.bf16.gmra.mrb[0].mxu0 %v1178
    %v1265 = vpop.f32.mrb[0].mxu0
    %v1266 = vadd.f32 0.0, %v1265
    %v1267 = vpop.f32.mrb[0].mxu0
    %v1268 = vpop.f32.mrb[0].mxu0
    %v1269 = vadd.f32 0.0, %v1268
    %v1270 = vpop.f32.mrb[0].mxu0
    %1271 = vmatprep.mubr.bf16.mxu0 0
    %1272 = vmatmul.mubr.bf16.gmra.mrb[0].mxu0 %v1181
    %v1273 = vpop.f32.mrb[0].mxu0
    %v1274 = vadd.f32 0.0, %v1273
    %v1275 = vpop.f32.mrb[0].mxu0
    %v1276 = vpop.f32.mrb[0].mxu0
    %v1277 = vadd.f32 0.0, %v1276
    %v1278 = vpop.f32.mrb[0].mxu0
    %1279 = vdwg.mxu0
    %v1280 = vadd.f32 %v907, %v1218
    %v1281 = vadd.f32 %v908, %v1221
    %v1282 = vadd.f32 %v909, %v1226
    %v1283 = vadd.f32 %v910, %v1229
    %v1284 = vadd.f32 %v911, %v1234
    %v1285 = vadd.f32 %v912, %v1237
    %v1286 = vadd.f32 %v913, %v1242
    %v1287 = vadd.f32 %v914, %v1245
    %v1288 = vadd.f32 %v915, %v1250
    %v1289 = vadd.f32 %v916, %v1253
    %v1290 = vadd.f32 %v917, %v1258
    %v1291 = vadd.f32 %v918, %v1261
    %v1292 = vadd.f32 %v919, %v1266
    %v1293 = vadd.f32 %v920, %v1269
    %v1294 = vadd.f32 %v921, %v1274
    %v1295 = vadd.f32 %v922, %v1277
    %v1296 = vld [vmem:[#allocation2] sm:$0xc]
    %v1297 = vld [vmem:[#allocation2 + $0xc] sm:$0xc]
    %v1298 = vld [vmem:[#allocation2 + $0x18] sm:$0xc]
    %v1299 = vld [vmem:[#allocation2 + $0x24] sm:$0xc]
    %v1300 = vld [vmem:[#allocation2 + $0x30] sm:$0xc]
    %v1301 = vld [vmem:[#allocation2 + $0x3c] sm:$0xc]
    %v1302 = vld [vmem:[#allocation2 + $0x48] sm:$0xc]
    %v1303 = vld [vmem:[#allocation2 + $0x54] sm:$0xc]
    %vm1320 = vcmask 1041408
    %vm1321 = vcmask 1045508
    %vm1322 = vmor %vm1320, %vm1321
    %v1323 = vrot.slane %v1296, 6
    %v1324 = vrot.slane %v1323, 4
    %v1325 = vrot.slane %v104, 6
    %v1326 = vsel %vm1322, %v1324, %v1325
    %v1327 = vrot.slane %v1325, 4
    %v1328 = vrot.slane %v923, 6
    %v1329 = vsel %vm1322, %v1327, %v1328
    %v1330 = vrot.slane %v1297, 6
    %v1331 = vrot.slane %v1330, 4
    %v1332 = vrot.slane %v106, 6
    %v1333 = vsel %vm1322, %v1331, %v1332
    %v1334 = vrot.slane %v1332, 4
    %v1335 = vrot.slane %v924, 6
    %v1336 = vsel %vm1322, %v1334, %v1335
    %v1337 = vrot.slane %v1298, 6
    %v1338 = vrot.slane %v1337, 4
    %v1339 = vrot.slane %v108, 6
    %v1340 = vsel %vm1322, %v1338, %v1339
    %v1341 = vrot.slane %v1339, 4
    %v1342 = vrot.slane %v925, 6
    %v1343 = vsel %vm1322, %v1341, %v1342
    %v1344 = vrot.slane %v1299, 6
    %v1345 = vrot.slane %v1344, 4
    %v1346 = vrot.slane %v110, 6
    %v1347 = vsel %vm1322, %v1345, %v1346
    %v1348 = vrot.slane %v1346, 4
    %v1349 = vrot.slane %v926, 6
    %v1350 = vsel %vm1322, %v1348, %v1349
    %v1351 = vrot.slane %v1300, 6
    %v1352 = vrot.slane %v1351, 4
    %v1353 = vrot.slane %v112, 6
    %v1354 = vsel %vm1322, %v1352, %v1353
    %v1355 = vrot.slane %v1353, 4
    %v1356 = vrot.slane %v927, 6
    %v1357 = vsel %vm1322, %v1355, %v1356
    %v1358 = vrot.slane %v1301, 6
    %v1359 = vrot.slane %v1358, 4
    %v1360 = vrot.slane %v114, 6
    %v1361 = vsel %vm1322, %v1359, %v1360
    %v1362 = vrot.slane %v1360, 4
    %v1363 = vrot.slane %v928, 6
    %v1364 = vsel %vm1322, %v1362, %v1363
    %v1365 = vrot.slane %v1302, 6
    %v1366 = vrot.slane %v1365, 4
    %v1367 = vrot.slane %v116, 6
    %v1368 = vsel %vm1322, %v1366, %v1367
    %v1369 = vrot.slane %v1367, 4
    %v1370 = vrot.slane %v929, 6
    %v1371 = vsel %vm1322, %v1369, %v1370
    %v1372 = vrot.slane %v1303, 6
    %v1373 = vrot.slane %v1372, 4
    %v1374 = vrot.slane %v118, 6
    %v1375 = vsel %vm1322, %v1373, %v1374
    %v1376 = vrot.slane %v1374, 4
    %v1377 = vrot.slane %v930, 6
    %v1378 = vsel %vm1322, %v1376, %v1377
    %s1379 = scalar_lea.vmem [#allocation5], 64
    %v1380 = vld [vmem:[%s1379] sm:$0xf]
    %v1381 = vld [vmem:[%s1379 + $0x4] sm:$0xf]
    %v1382 = vld [vmem:[%s1379 + $0x8] sm:$0xf]
    %v1383 = vld [vmem:[%s1379 + $0xc] sm:$0xf]
    %v1384 = vunpack.c.l.b16 %v1326
    %v1385 = vunpack.c.l.b16 %v1329
    %v1386 = vunpack.c.l.b16 %v1333
    %v1387 = vunpack.c.l.b16 %v1336
    %v1388 = vunpack.c.l.b16 %v1340
    %v1389 = vunpack.c.l.b16 %v1343
    %v1390 = vunpack.c.l.b16 %v1347
    %v1391 = vunpack.c.l.b16 %v1350
    %v1392 = vunpack.c.l.b16 %v1354
    %v1393 = vunpack.c.l.b16 %v1357
    %v1394 = vunpack.c.l.b16 %v1361
    %v1395 = vunpack.c.l.b16 %v1364
    %v1396 = vunpack.c.l.b16 %v1368
    %v1397 = vunpack.c.l.b16 %v1371
    %v1398 = vunpack.c.l.b16 %v1375
    %v1399 = vunpack.c.l.b16 %v1378
    %v1400 = vpack.c.b16 %v1385, %v1384
    %v1401 = vpack.c.b16 %v1387, %v1386
    %v1402 = vpack.c.b16 %v1389, %v1388
    %v1403 = vpack.c.b16 %v1391, %v1390
    %v1404 = vpack.c.b16 %v1393, %v1392
    %v1405 = vpack.c.b16 %v1395, %v1394
    %v1406 = vpack.c.b16 %v1397, %v1396
    %v1407 = vpack.c.b16 %v1399, %v1398
    %v1412 = vunpack.c.l.b16 %v1380
    %v1413 = vunpack.c.l.b16 %v1381
    %v1414 = vunpack.c.l.b16 %v1382
    %v1415 = vunpack.c.l.b16 %v1383
    %v1416 = vpack.c.b16 %v1413, %v1412
    %v1417 = vpack.c.b16 %v1415, %v1414
    %v1421 = vsel %vm367, %v1400, 0
    %v1424 = vsel %vm367, %v1401, 0
    %v1427 = vsel %vm367, %v1402, 0
    %v1430 = vsel %vm367, %v1403, 0
    %v1433 = vsel %vm367, %v1404, 0
    %v1436 = vsel %vm367, %v1405, 0
    %v1439 = vsel %vm367, %v1406, 0
    %v1442 = vsel %vm367, %v1407, 0
    %1444 = vmatprep.subr.bf16.mxu0 0
    %1445 = vmatpush1.bf16.msra.mxu0 %v1416
    %1446 = vmatprep.subr.bf16.mxu0 0
    %1447 = vmatpush1.bf16.msra.mxu0 %v1417
    %1448 = vmatprep.subr.bf16.mxu0 0
    %1449 = vmatpush1.bf16.msra.mxu0 0
    %1450 = vmatprep.subr.bf16.mxu0 0
    %1451 = vmatpush1.bf16.msra.mxu0 0
    %1452 = vmatprep.subr.bf16.mxu0 0
    %1453 = vmatpush1.bf16.msra.mxu0 0
    %1454 = vmatprep.subr.bf16.mxu0 0
    %1455 = vmatpush1.bf16.msra.mxu0 0
    %1456 = vmatprep.subr.bf16.mxu0 0
    %1457 = vmatpush1.bf16.msra.mxu0 0
    %1458 = vmatprep.subr.bf16.mxu0 0
    %1459 = vmatpush1.bf16.msra.mxu0 0
    %1460 = vmatprep.subr.bf16.mxu0 0
    %1461 = vmatpush1.bf16.msra.mxu0 0
    %1462 = vmatprep.subr.bf16.mxu0 0
    %1463 = vmatpush1.bf16.msra.mxu0 0
    %1464 = vmatprep.subr.bf16.mxu0 0
    %1465 = vmatpush1.bf16.msra.mxu0 0
    %1466 = vmatprep.subr.bf16.mxu0 0
    %1467 = vmatpush1.bf16.msra.mxu0 0
    %1468 = vmatprep.subr.bf16.mxu0 0
    %1469 = vmatpush1.bf16.msra.mxu0 0
    %1470 = vmatprep.subr.bf16.mxu0 0
    %1471 = vmatpush1.bf16.msra.mxu0 0
    %1472 = vmatprep.subr.bf16.mxu0 0
    %1473 = vmatpush1.bf16.msra.mxu0 0
    %1474 = vmatprep.subr.bf16.mxu0 0
    %1475 = vmatpush1.bf16.msra.mxu0 0
    %1476 = vmatprep.mubr.bf16.mxu0 0
    %1477 = vmatmul.mubr.bf16.gmra.mrb[0].mxu0 %v1421
    %v1478 = vpop.f32.mrb[0].mxu0
    %v1479 = vadd.f32 0.0, %v1478
    %v1480 = vpop.f32.mrb[0].mxu0
    %v1481 = vpop.f32.mrb[0].mxu0
    %v1482 = vadd.f32 0.0, %v1481
    %v1483 = vpop.f32.mrb[0].mxu0
    %1484 = vmatprep.mubr.bf16.mxu0 0
    %1485 = vmatmul.mubr.bf16.gmra.mrb[0].mxu0 %v1424
    %v1486 = vpop.f32.mrb[0].mxu0
    %v1487 = vadd.f32 0.0, %v1486
    %v1488 = vpop.f32.mrb[0].mxu0
    %v1489 = vpop.f32.mrb[0].mxu0
    %v1490 = vadd.f32 0.0, %v1489
    %v1491 = vpop.f32.mrb[0].mxu0
    %1492 = vmatprep.mubr.bf16.mxu0 0
    %1493 = vmatmul.mubr.bf16.gmra.mrb[0].mxu0 %v1427
    %v1494 = vpop.f32.mrb[0].mxu0
    %v1495 = vadd.f32 0.0, %v1494
    %v1496 = vpop.f32.mrb[0].mxu0
    %v1497 = vpop.f32.mrb[0].mxu0
    %v1498 = vadd.f32 0.0, %v1497
    %v1499 = vpop.f32.mrb[0].mxu0
    %1500 = vmatprep.mubr.bf16.mxu0 0
    %1501 = vmatmul.mubr.bf16.gmra.mrb[0].mxu0 %v1430
    %v1502 = vpop.f32.mrb[0].mxu0
    %v1503 = vadd.f32 0.0, %v1502
    %v1504 = vpop.f32.mrb[0].mxu0
    %v1505 = vpop.f32.mrb[0].mxu0
    %v1506 = vadd.f32 0.0, %v1505
    %v1507 = vpop.f32.mrb[0].mxu0
    %1508 = vmatprep.mubr.bf16.mxu0 0
    %1509 = vmatmul.mubr.bf16.gmra.mrb[0].mxu0 %v1433
    %v1510 = vpop.f32.mrb[0].mxu0
    %v1511 = vadd.f32 0.0, %v1510
    %v1512 = vpop.f32.mrb[0].mxu0
    %v1513 = vpop.f32.mrb[0].mxu0
    %v1514 = vadd.f32 0.0, %v1513
    %v1515 = vpop.f32.mrb[0].mxu0
    %1516 = vmatprep.mubr.bf16.mxu0 0
    %1517 = vmatmul.mubr.bf16.gmra.mrb[0].mxu0 %v1436
    %v1518 = vpop.f32.mrb[0].mxu0
    %v1519 = vadd.f32 0.0, %v1518
    %v1520 = vpop.f32.mrb[0].mxu0
    %v1521 = vpop.f32.mrb[0].mxu0
    %v1522 = vadd.f32 0.0, %v1521
    %v1523 = vpop.f32.mrb[0].mxu0
    %1524 = vmatprep.mubr.bf16.mxu0 0
    %1525 = vmatmul.mubr.bf16.gmra.mrb[0].mxu0 %v1439
    %v1526 = vpop.f32.mrb[0].mxu0
    %v1527 = vadd.f32 0.0, %v1526
    %v1528 = vpop.f32.mrb[0].mxu0
    %v1529 = vpop.f32.mrb[0].mxu0
    %v1530 = vadd.f32 0.0, %v1529
    %v1531 = vpop.f32.mrb[0].mxu0
    %1532 = vmatprep.mubr.bf16.mxu0 0
    %1533 = vmatmul.mubr.bf16.gmra.mrb[0].mxu0 %v1442
    %v1534 = vpop.f32.mrb[0].mxu0
    %v1535 = vadd.f32 0.0, %v1534
    %v1536 = vpop.f32.mrb[0].mxu0
    %v1537 = vpop.f32.mrb[0].mxu0
    %v1538 = vadd.f32 0.0, %v1537
    %v1539 = vpop.f32.mrb[0].mxu0
    %1540 = vdwg.mxu0
    %v1541 = vadd.f32 %v1280, %v1479
    %v1542 = vadd.f32 %v1281, %v1482
    %v1543 = vadd.f32 %v1282, %v1487
    %v1544 = vadd.f32 %v1283, %v1490
    %v1545 = vadd.f32 %v1284, %v1495
    %v1546 = vadd.f32 %v1285, %v1498
    %v1547 = vadd.f32 %v1286, %v1503
    %v1548 = vadd.f32 %v1287, %v1506
    %v1549 = vadd.f32 %v1288, %v1511
    %v1550 = vadd.f32 %v1289, %v1514
    %v1551 = vadd.f32 %v1290, %v1519
    %v1552 = vadd.f32 %v1291, %v1522
    %v1553 = vadd.f32 %v1292, %v1527
    %v1554 = vadd.f32 %v1293, %v1530
    %v1555 = vadd.f32 %v1294, %v1535
    %v1556 = vadd.f32 %v1295, %v1538
    %v1557 = vld [vmem:[#allocation7] sm:$0xff]
    %v1558 = vld [vmem:[#allocation7 + $0x8] sm:$0xff]
    %v1559 = vadd.f32 %v1541, %v1557
    %v1560 = vadd.f32 %v1542, %v1558
    %v1561 = vadd.f32 %v1543, %v1557
    %v1562 = vadd.f32 %v1544, %v1558
    %v1563 = vadd.f32 %v1545, %v1557
    %v1564 = vadd.f32 %v1546, %v1558
    %v1565 = vadd.f32 %v1547, %v1557
    %v1566 = vadd.f32 %v1548, %v1558
    %v1567 = vadd.f32 %v1549, %v1557
    %v1568 = vadd.f32 %v1550, %v1558
    %v1569 = vadd.f32 %v1551, %v1557
    %v1570 = vadd.f32 %v1552, %v1558
    %v1571 = vadd.f32 %v1553, %v1557
    %v1572 = vadd.f32 %v1554, %v1558
    %v1573 = vadd.f32 %v1555, %v1557
    %v1574 = vadd.f32 %v1556, %v1558
    %v1575 = vmax.f32 %v1559, %v1560
    %v1576 = vrot.slane %v1575, 4
    %v1577 = vmax.f32 %v1575, %v1576
    %v1578 = vrot.slane %v1577, 2
    %v1579 = vmax.f32 %v1577, %v1578
    %v1580 = vrot.slane %v1579, 1
    %v1581 = vmax.f32 %v1579, %v1580
    %v1582 = vmax.f32 %v1561, %v1562
    %v1583 = vrot.slane %v1582, 4
    %v1584 = vmax.f32 %v1582, %v1583
    %v1585 = vrot.slane %v1584, 2
    %v1586 = vmax.f32 %v1584, %v1585
    %v1587 = vrot.slane %v1586, 1
    %v1588 = vmax.f32 %v1586, %v1587
    %v1589 = vmax.f32 %v1563, %v1564
    %v1590 = vrot.slane %v1589, 4
    %v1591 = vmax.f32 %v1589, %v1590
    %v1592 = vrot.slane %v1591, 2
    %v1593 = vmax.f32 %v1591, %v1592
    %v1594 = vrot.slane %v1593, 1
    %v1595 = vmax.f32 %v1593, %v1594
    %v1596 = vmax.f32 %v1565, %v1566
    %v1597 = vrot.slane %v1596, 4
    %v1598 = vmax.f32 %v1596, %v1597
    %v1599 = vrot.slane %v1598, 2
    %v1600 = vmax.f32 %v1598, %v1599
    %v1601 = vrot.slane %v1600, 1
    %v1602 = vmax.f32 %v1600, %v1601
    %v1603 = vmax.f32 %v1567, %v1568
    %v1604 = vrot.slane %v1603, 4
    %v1605 = vmax.f32 %v1603, %v1604
    %v1606 = vrot.slane %v1605, 2
    %v1607 = vmax.f32 %v1605, %v1606
    %v1608 = vrot.slane %v1607, 1
    %v1609 = vmax.f32 %v1607, %v1608
    %v1610 = vmax.f32 %v1569, %v1570
    %v1611 = vrot.slane %v1610, 4
    %v1612 = vmax.f32 %v1610, %v1611
    %v1613 = vrot.slane %v1612, 2
    %v1614 = vmax.f32 %v1612, %v1613
    %v1615 = vrot.slane %v1614, 1
    %v1616 = vmax.f32 %v1614, %v1615
    %v1617 = vmax.f32 %v1571, %v1572
    %v1618 = vrot.slane %v1617, 4
    %v1619 = vmax.f32 %v1617, %v1618
    %v1620 = vrot.slane %v1619, 2
    %v1621 = vmax.f32 %v1619, %v1620
    %v1622 = vrot.slane %v1621, 1
    %v1623 = vmax.f32 %v1621, %v1622
    %v1624 = vmax.f32 %v1573, %v1574
    %v1625 = vrot.slane %v1624, 4
    %v1626 = vmax.f32 %v1624, %v1625
    %v1627 = vrot.slane %v1626, 2
    %v1628 = vmax.f32 %v1626, %v1627
    %v1629 = vrot.slane %v1628, 1
    %v1630 = vmax.f32 %v1628, %v1629
    %v1631 = vld [vmem:[#allocation8] sm:$0x1]
    %v1633 = vlaneseq
    %v1634 = vshrl.u32 %v1633, 7
    %v1635 = vsub.s32 0, %v1634
    %v1636 = vrot.slane %v1631, %v1635
    %v1638 = vadd.f32 %v1581, %v1636
    %v1639 = vadd.f32 %v1588, %v1636
    %v1640 = vadd.f32 %v1595, %v1636
    %v1641 = vadd.f32 %v1602, %v1636
    %v1642 = vadd.f32 %v1609, %v1636
    %v1643 = vadd.f32 %v1616, %v1636
    %v1644 = vadd.f32 %v1623, %v1636
    %v1645 = vadd.f32 %v1630, %v1636
    %v1646 = vmax.f32 %v1638, 0.0
    %v1647 = vmax.f32 %v1639, 0.0
    %v1648 = vmax.f32 %v1640, 0.0
    %v1649 = vmax.f32 %v1641, 0.0
    %v1650 = vmax.f32 %v1642, 0.0
    %v1651 = vmax.f32 %v1643, 0.0
    %v1652 = vmax.f32 %v1644, 0.0
    %v1653 = vmax.f32 %v1645, 0.0
    %v1654 = vpack.c.bf16 %v1646, %v1646
    %v1655 = vpack.c.bf16 %v1647, %v1647
    %v1656 = vpack.c.bf16 %v1648, %v1648
    %v1657 = vpack.c.bf16 %v1649, %v1649
    %v1658 = vpack.c.bf16 %v1650, %v1650
    %v1659 = vpack.c.bf16 %v1651, %v1651
    %v1660 = vpack.c.bf16 %v1652, %v1652
    %v1661 = vpack.c.bf16 %v1653, %v1653
    %v1662 = vld [vmem:[#allocation10] sm:$0xf]
    %v1663 = vld [vmem:[#allocation10 + $0x4] sm:$0xf]
    %v1664 = vld [vmem:[#allocation10 + $0x8] sm:$0xf]
    %v1665 = vld [vmem:[#allocation10 + $0xc] sm:$0xf]
    %v1666 = vld [vmem:[#allocation10 + $0x10] sm:$0xf]
    %v1667 = vld [vmem:[#allocation10 + $0x14] sm:$0xf]
    %v1668 = vld [vmem:[#allocation10 + $0x18] sm:$0xf]
    %v1669 = vld [vmem:[#allocation10 + $0x1c] sm:$0xf]
    %v1670 = vld [vmem:[#allocation10 + $0x20] sm:$0xf]
    %v1671 = vld [vmem:[#allocation10 + $0x24] sm:$0xf]
    %v1672 = vld [vmem:[#allocation10 + $0x28] sm:$0xf]
    %v1673 = vld [vmem:[#allocation10 + $0x2c] sm:$0xf]
    %v1674 = vld [vmem:[#allocation10 + $0x30] sm:$0xf]
    %v1675 = vld [vmem:[#allocation10 + $0x34] sm:$0xf]
    %v1676 = vld [vmem:[#allocation10 + $0x38] sm:$0xf]
    %v1677 = vld [vmem:[#allocation10 + $0x3c] sm:$0xf]
    %v1678 = vld [vmem:[#allocation11] sm:$0x1]
    %v1680 = vlaneseq
    %v1681 = vshrl.u32 %v1680, 7
    %v1682 = vsub.s32 0, %v1681
    %v1683 = vrot.slane %v1678, %v1682
    %v1693 = vunpack.c.l.b16 %v1654
    %v1694 = vunpack.c.l.b16 %v1655
    %v1695 = vunpack.c.l.b16 %v1656
    %v1696 = vunpack.c.l.b16 %v1657
    %v1697 = vunpack.c.l.b16 %v1658
    %v1698 = vunpack.c.l.b16 %v1659
    %v1699 = vunpack.c.l.b16 %v1660
    %v1700 = vunpack.c.l.b16 %v1661
    %v1701 = vrot.slane %v1694, 7
    %vm1702 = vcmask 1041409
    %v1703 = vsel %vm1702, %v1701, %v1693
    %v1704 = vrot.slane %v1695, 6
    %vm1705 = vcmask 1042434
    %v1706 = vsel %vm1705, %v1704, %v1703
    %v1707 = vrot.slane %v1696, 5
    %vm1708 = vcmask 1043459
    %v1709 = vsel %vm1708, %v1707, %v1706
    %v1710 = vrot.slane %v1697, 4
    %vm1711 = vcmask 1044484
    %v1712 = vsel %vm1711, %v1710, %v1709
    %v1713 = vrot.slane %v1698, 3
    %vm1714 = vcmask 1045509
    %v1715 = vsel %vm1714, %v1713, %v1712
    %v1716 = vrot.slane %v1699, 2
    %vm1717 = vcmask 1046534
    %v1718 = vsel %vm1717, %v1716, %v1715
    %v1719 = vrot.slane %v1700, 1
    %vm1720 = vcmask 1047559
    %v1721 = vsel %vm1720, %v1719, %v1718
    %v1722 = vpack.c.b16 %v1721, %v1721
    %v1740 = vunpack.c.l.b16 %v1662
    %v1741 = vunpack.c.l.b16 %v1663
    %v1742 = vunpack.c.l.b16 %v1664
    %v1743 = vunpack.c.l.b16 %v1665
    %v1744 = vunpack.c.l.b16 %v1666
    %v1745 = vunpack.c.l.b16 %v1667
    %v1746 = vunpack.c.l.b16 %v1668
    %v1747 = vunpack.c.l.b16 %v1669
    %v1748 = vunpack.c.l.b16 %v1670
    %v1749 = vunpack.c.l.b16 %v1671
    %v1750 = vunpack.c.l.b16 %v1672
    %v1751 = vunpack.c.l.b16 %v1673
    %v1752 = vunpack.c.l.b16 %v1674
    %v1753 = vunpack.c.l.b16 %v1675
    %v1754 = vunpack.c.l.b16 %v1676
    %v1755 = vunpack.c.l.b16 %v1677
    %v1756 = vpack.c.b16 %v1741, %v1740
    %v1757 = vpack.c.b16 %v1743, %v1742
    %v1758 = vpack.c.b16 %v1745, %v1744
    %v1759 = vpack.c.b16 %v1747, %v1746
    %v1760 = vpack.c.b16 %v1749, %v1748
    %v1761 = vpack.c.b16 %v1751, %v1750
    %v1762 = vpack.c.b16 %v1753, %v1752
    %v1763 = vpack.c.b16 %v1755, %v1754
    %1772 = vmatprep.subr.bf16.mxu0 0
    %1773 = vmatpush1.bf16.msra.mxu0 %v1756
    %1774 = vmatprep.subr.bf16.mxu0 0
    %1775 = vmatpush1.bf16.msra.mxu0 %v1757
    %1776 = vmatprep.subr.bf16.mxu0 0
    %1777 = vmatpush1.bf16.msra.mxu0 %v1758
    %1778 = vmatprep.subr.bf16.mxu0 0
    %1779 = vmatpush1.bf16.msra.mxu0 %v1759
    %1780 = vmatprep.subr.bf16.mxu0 0
    %1781 = vmatpush1.bf16.msra.mxu0 %v1760
    %1782 = vmatprep.subr.bf16.mxu0 0
    %1783 = vmatpush1.bf16.msra.mxu0 %v1761
    %1784 = vmatprep.subr.bf16.mxu0 0
    %1785 = vmatpush1.bf16.msra.mxu0 %v1762
    %1786 = vmatprep.subr.bf16.mxu0 0
    %1787 = vmatpush1.bf16.msra.mxu0 %v1763
    %1788 = vmatprep.subr.bf16.mxu0 0
    %1789 = vmatpush1.bf16.msra.mxu0 0
    %1790 = vmatprep.subr.bf16.mxu0 0
    %1791 = vmatpush1.bf16.msra.mxu0 0
    %1792 = vmatprep.subr.bf16.mxu0 0
    %1793 = vmatpush1.bf16.msra.mxu0 0
    %1794 = vmatprep.subr.bf16.mxu0 0
    %1795 = vmatpush1.bf16.msra.mxu0 0
    %1796 = vmatprep.subr.bf16.mxu0 0
    %1797 = vmatpush1.bf16.msra.mxu0 0
    %1798 = vmatprep.subr.bf16.mxu0 0
    %1799 = vmatpush1.bf16.msra.mxu0 0
    %1800 = vmatprep.subr.bf16.mxu0 0
    %1801 = vmatpush1.bf16.msra.mxu0 0
    %1802 = vmatprep.subr.bf16.mxu0 0
    %1803 = vmatpush1.bf16.msra.mxu0 0
    %1804 = vmatprep.mubr.bf16.mxu0 0
    %1805 = vmatmul.mubr.bf16.gmra.mrb[0].mxu0 %v1722
    %v1806 = vpop.f32.mrb[0].mxu0
    %v1807 = vadd.f32 %v1683, %v1806
    %v1808 = vpop.f32.mrb[0].mxu0
    %v1809 = vpop.f32.mrb[0].mxu0
    %v1810 = vpop.f32.mrb[0].mxu0
    %1811 = vdwg.mxu0
    %1812 = vst [vmem:[#allocation13] sm:$0xff] %v1807
    // Predicated region
    $region50: #{textcnn_forward.1} parent=1 // pred_check
      _
    $region51: #{textcnn_forward.1} parent=1 // pred_check_branch
      %1814 = sbr.rel (0) target = $region53
    $region52: #{textcnn_forward.1} parent=1 // pred_region
      %s1816 = ssub.s32 128, 128
      %1817 = vsyncadd [#allocation4], %s1816
      %s1819 = sshll.u32 [#allocation13], 4
      %s1820 = int_to_ptr.vmem [resolvable:$true] %s1819
      %1822 = dma.vmem_to_hbm [thread:$0]  %s1820, 128, %s6, [#allocation4]
    $region53: #{textcnn_forward.1} parent=1 // pred_fallthru
      _
    // Predicated region
    $region54: #{textcnn_forward.1} parent=1 // pred_check
      _
    $region55: #{textcnn_forward.1} parent=1 // pred_check_branch
      %1824 = sbr.rel (0) target = $region57
    $region56: #{textcnn_forward.1} parent=1 // pred_region
      %1825 = dma.done [#allocation4], 128
    $region57: #{textcnn_forward.1} parent=1 // pred_fallthru
      _
    %1826 = vsyncpa [#allocation3], 1
    %1827 = vsyncpa [#allocation6], 1
    %1828 = vsyncpa [#allocation9], 1
    %1829 = vsyncpa [#allocation12], 1
    %1830 = vsyncpa [#allocation4], 1

</llo_original>
